<compile_context>
chip_gen: v6e
topology: v6e:2x2x1
jax: 0.10.0
libtpu: 0.0.40
codegen_flags: <defaults>
</compile_context>

<pallas_src>
import functools
from dataclasses import dataclass

import jax
import jax.numpy as jnp
import numpy as np
from jax.experimental import pallas as pl
from jax.experimental.pallas import tpu as pltpu

IN_CH = 3          # RGB input
FEAT_DIM = 128     # stand-in for NET_OUT_DIM[args.backbone]
N_BISECT = 18      # bisection iterations for the top-k threshold search
MAX_TILE_N = 4096  # target pixel-tile size (multiple of 128) for realistic images


@dataclass
class Args:
    img_size: int = 16
    n_scales: int = 2
    topk: float = 0.1
    backbone: str = "synthetic"


def _pick_tile(n, max_tile):
    """Largest multiple-of-128 divisor of n that is <= max_tile, else n itself."""
    if n <= 128:
        return n
    t = (min(max_tile, n) // 128) * 128
    while t >= 128:
        if n % t == 0:
            return t
        t -= 128
    return n


def _dgad_scale_kernel(img_ref, we_ref, be_ref, wc_ref, bc_ref, out_ref,
                       smap_ref, *, k, tile_n, n_pix):
    """One (image b, pixel-tile t) grid step of a single pyramid scale.

      img_ref  : (1, 3, TILE_N)  image pixel tile (auto-pipelined)
      we_ref   : (FEAT_DIM, 3)   encoder pointwise-conv weight
      be_ref   : (FEAT_DIM, 1)   encoder bias
      wc_ref   : (1, FEAT_DIM)   scoring 1x1-conv weight
      bc_ref   : (1, 1)          scoring 1x1-conv bias
      out_ref  : (1, 1, 1)       per-image score (written on last tile only)
      smap_ref : (1, n_pix)      persistent VMEM staging of this image's score map
    """
    t = pl.program_id(1)

    img = img_ref[0]                                           # (3, TILE_N)

    # encoder pointwise conv (3 -> FEAT_DIM) + bias + ReLU, on the MXU.
    feat = jnp.dot(we_ref[...], img,
                   preferred_element_type=jnp.float32) + be_ref[...]
    feat = jnp.maximum(feat, 0.0)                              # (FEAT_DIM, TILE_N)

    # scoring 1x1 conv (FEAT_DIM -> 1), also on the MXU.
    sc = jnp.dot(wc_ref[...], feat,
                 preferred_element_type=jnp.float32) + bc_ref[...]   # (1, TILE_N)

    off = pl.multiple_of(t * tile_n, tile_n)
    smap_ref[:, pl.ds(off, tile_n)] = sc

    # finalize: mean of the k largest |score| values, once the map is complete.
    @pl.when(t == pl.num_programs(1) - 1)
    def _finalize():
        smap = smap_ref[...]                                   # (1, n_pix)
        if k > 0:
            a = jnp.abs(smap)
            kf = jnp.float32(k)
            hi = jnp.max(a, axis=1, keepdims=True)             # (1, 1)
            lo = jnp.zeros_like(hi)

            def body(_, carry):
                lo_c, hi_c = carry
                mid = 0.5 * (lo_c + hi_c)
                cnt = jnp.sum((a > mid).astype(jnp.float32), axis=1, keepdims=True)
                go_up = cnt >= kf
                return (jnp.where(go_up, mid, lo_c), jnp.where(go_up, hi_c, mid))

            lo, hi = jax.lax.fori_loop(0, N_BISECT, body, (lo, hi), unroll=True)
            # entries strictly above hi are definitely in the top-k (< k of them);
            # the remaining (k - cnt_gt) entries lie in (lo, hi], approximated by hi
            # (error <= max * 2^-N_BISECT, far below the fp32/tolerance needs).
            gt = (a > hi).astype(jnp.float32)
            sum_gt = jnp.sum(a * gt, axis=1, keepdims=True)
            cnt_gt = jnp.sum(gt, axis=1, keepdims=True)
            res = (sum_gt + (kf - cnt_gt) * hi) * (1.0 / k)
        else:
            res = jnp.sum(smap, axis=1, keepdims=True) * (1.0 / n_pix)
        out_ref[...] = jnp.reshape(res, (1, 1, 1))


def _scale_score(x, we, be, wc, bc, k, *, max_tile=MAX_TILE_N):
    """Per-image score for one pyramid scale. x: (B, 3, N) f32. Returns (B, 1)."""
    B, C, n = x.shape
    tile_n = _pick_tile(n, max_tile)
    nt = n // tile_n

    kernel = functools.partial(_dgad_scale_kernel, k=k, tile_n=tile_n, n_pix=n)

    # deeper image buffering for large tile counts (v5e: hide the 12 B/pixel read);
    # guarded so tiny grids use the default double-buffer path.
    img_kwargs = {}
    if nt >= 3:
        img_kwargs = dict(pipeline_mode=pl.Buffered(3))
    img_spec = pl.BlockSpec((1, C, tile_n), lambda b, t: (b, 0, t), **img_kwargs)

    flops = (2 * B * n * FEAT_DIM * IN_CH          # encoder conv
             + 2 * B * n * FEAT_DIM                # scoring conv
             + B * n * (N_BISECT + 6))             # bisection passes (rough)
    bytes_accessed = (B * C * n + 2 * B * n + B
                      + FEAT_DIM * (IN_CH + 2) + 2) * 4
    cost = pl.CostEstimate(flops=flops, transcendentals=0,
                           bytes_accessed=bytes_accessed)

    grid_spec = pltpu.PrefetchScalarGridSpec(
        num_scalar_prefetch=0,
        grid=(B, nt),                              # (batch parallel, pixel tiles arbitrary)
        in_specs=[img_spec,
                  pl.BlockSpec((FEAT_DIM, IN_CH), lambda b, t: (0, 0)),
                  pl.BlockSpec((FEAT_DIM, 1), lambda b, t: (0, 0)),
                  pl.BlockSpec((1, FEAT_DIM), lambda b, t: (0, 0)),
                  pl.BlockSpec((1, 1), lambda b, t: (0, 0))],
        out_specs=pl.BlockSpec((1, 1, 1), lambda b, t: (b, 0, 0)),
        scratch_shapes=[pltpu.VMEM((1, n), jnp.float32)],      # per-image score map
    )

    out = pl.pallas_call(
        kernel,
        out_shape=jax.ShapeDtypeStruct((B, 1, 1), jnp.float32),
        grid_spec=grid_spec,
        compiler_params=pltpu.CompilerParams(
            dimension_semantics=("parallel", "arbitrary"),
            vmem_limit_bytes=48 * 1024 * 1024),    # explicit budget, fits v7x's 64 MiB
        cost_estimate=cost,
    )(x, we, be, wc, bc)
    return out.reshape(B, 1)


def _nearest_resize_nchw(image, out_size):
    """F.interpolate(image, size=out_size) with default mode='nearest', NCHW."""
    B, C, H, W = image.shape
    idx_h = jnp.floor(jnp.arange(out_size) * (H / out_size)).astype(jnp.int32)
    idx_w = jnp.floor(jnp.arange(out_size) * (W / out_size)).astype(jnp.int32)
    return image[:, :, idx_h, :][:, :, :, idx_w]


def dgad_net_forward(image, params, args, *, max_tile=MAX_TILE_N):
    """image: (B, 3, H, W) f32 (NCHW, like torch). Returns (score (B, 1), None)."""
    if args.n_scales == 0:
        raise ValueError
    we, be, wc, bc = params
    B = image.shape[0]

    total = jnp.zeros((B, 1), jnp.float32)
    for s in range(args.n_scales):
        img_s = (_nearest_resize_nchw(image, args.img_size // 2 ** s)
                 if s > 0 else image)
        _, C, H, W = img_s.shape
        n = H * W
        x = img_s.reshape(B, C, n).astype(jnp.float32)
        k = max(int(n * args.topk), 1) if args.topk > 0 else 0
        total = total + _scale_score(x, we, be, wc, bc, k, max_tile=max_tile)
    return total * (1.0 / args.n_scales), None


def _reference_forward(image, params, args):
    """Pure-JAX reference mirroring the torch forward semantics (exact top-k)."""
    we, be, wc, bc = params
    outs = []
    for s in range(args.n_scales):
        img_s = (_nearest_resize_nchw(image, args.img_size // 2 ** s)
                 if s > 0 else image)
        B, C, H, W = img_s.shape
        x = img_s.reshape(B, C, H * W)
        feat = jnp.maximum(jnp.einsum('fc,bcn->bfn', we, x) + be[None], 0.0)
        smap = jnp.einsum('of,bfn->bon', wc, feat)[:, 0, :] + bc[0, 0]   # (B, N)
        if args.topk > 0:
            kk = max(int(smap.shape[1] * args.topk), 1)
            vals = jax.lax.top_k(jnp.abs(smap), kk)[0]
            sc = jnp.mean(vals, axis=1, keepdims=True)
        else:
            sc = jnp.mean(smap, axis=1, keepdims=True)
        outs.append(sc)
    scores = jnp.concatenate(outs, axis=1)
    return jnp.mean(scores, axis=1).reshape(-1, 1)


if __name__ == "__main__":
    args = Args(img_size=16, n_scales=2, topk=0.1)

    key = jax.random.PRNGKey(0)
    k_img, k_we, k_be, k_wc, k_bc = jax.random.split(key, 5)

    image = jax.random.normal(k_img, (2, IN_CH, args.img_size, args.img_size),
                              dtype=jnp.float32)

    # deterministic parameter init (synthetic encoder + scoring conv)
    we = 0.1 * jax.random.normal(k_we, (FEAT_DIM, IN_CH), dtype=jnp.float32)
    be = 0.05 * jax.random.normal(k_be, (FEAT_DIM, 1), dtype=jnp.float32)
    wc = 0.1 * jax.random.normal(k_wc, (1, FEAT_DIM), dtype=jnp.float32)  # Conv2d(Cf,1,1)
    bc = 0.05 * jax.random.normal(k_bc, (1, 1), dtype=jnp.float32)
    params = (we, be, wc, bc)

    # max_tile=128 so scale 0 (N=256) exercises the multi-tile pipelined path (2 tiles)
    # while scale 1 (N=64) exercises the single full-extent tile path.
    score, aux = dgad_net_forward(image, params, args, max_tile=128)
    score = jax.block_until_ready(score)
    assert aux is None and score.shape == (2, 1)

    ref = jax.block_until_ready(_reference_forward(image, params, args))
    np.testing.assert_allclose(np.asarray(score), np.asarray(ref),
                               rtol=1e-2, atol=1e-2)

    print("KERNEL_OK")
</pallas_src>

<mosaic_0001>
module attributes {stable_mosaic.version = 11 : i64} {
  func.func @_dgad_scale_kernel(%arg0: i32, %arg1: i32, %arg2: memref<1x3x128xf32, #tpu.memory_space<vmem>>, %arg3: memref<128x3xf32, #tpu.memory_space<vmem>>, %arg4: memref<128x1xf32, #tpu.memory_space<vmem>>, %arg5: memref<1x128xf32, #tpu.memory_space<vmem>>, %arg6: memref<1x1xf32, #tpu.memory_space<vmem>>, %arg7: memref<1x1x1xf32, #tpu.memory_space<vmem>>, %arg8: memref<1x256xf32, #tpu.memory_space<vmem>>) attributes {dimension_semantics = [#tpu.dimension_semantics<parallel>, #tpu.dimension_semantics<arbitrary>], iteration_bounds = array<i64: 2, 2>, scalar_prefetch = 0 : i64, scratch_operands = 1 : i64, tpu.core_type = #tpu.core_type<tc>, window_params = [{transform_indices = @transform_0, window_bounds = array<i64: 1, 3, 128>}, {pipeline_mode = #tpu.pipeline_mode<synchronous>, transform_indices = @transform_1, window_bounds = array<i64: 128, 3>}, {pipeline_mode = #tpu.pipeline_mode<synchronous>, transform_indices = @transform_2, window_bounds = array<i64: 128, 1>}, {pipeline_mode = #tpu.pipeline_mode<synchronous>, transform_indices = @transform_3, window_bounds = array<i64: 1, 128>}, {pipeline_mode = #tpu.pipeline_mode<synchronous>, transform_indices = @transform_4, window_bounds = array<i64: 1, 1>}, {transform_indices = @transform_5, window_bounds = array<i64: 1, 1, 1>}]} {
    %c0 = arith.constant 0 : index
    %c0_0 = arith.constant 0 : index
    %c0_1 = arith.constant 0 : index
    %0 = vector.load %arg2[%c0, %c0_0, %c0_1] : memref<1x3x128xf32, #tpu.memory_space<vmem>>, vector<1x3x128xf32>
    %1 = vector.shape_cast %0 : vector<1x3x128xf32> to vector<3x128xf32>
    %c0_2 = arith.constant 0 : index
    %c0_3 = arith.constant 0 : index
    %2 = vector.load %arg3[%c0_2, %c0_3] : memref<128x3xf32, #tpu.memory_space<vmem>>, vector<128x3xf32>
    %cst = arith.constant dense<0.000000e+00> : vector<128x128xf32>
    %3 = tpu.matmul %2, %1, %cst {dimension_numbers = #tpu.dot_dimension_numbers<[1], [0], [0], [1], [0, 0, 1, 1], [], []>} : vector<128x3xf32>, vector<3x128xf32>, vector<128x128xf32> -> vector<128x128xf32>
    %c0_4 = arith.constant 0 : index
    %c0_5 = arith.constant 0 : index
    %4 = vector.load %arg4[%c0_4, %c0_5] : memref<128x1xf32, #tpu.memory_space<vmem>>, vector<128x1xf32>
    %5 = vector.broadcast %4 : vector<128x1xf32> to vector<128x128xf32>
    %6 = arith.addf %3, %5 : vector<128x128xf32>
    %cst_6 = arith.constant 0.000000e+00 : f32
    %7 = vector.broadcast %cst_6 : f32 to vector<128x128xf32>
    %8 = arith.maximumf %6, %7 : vector<128x128xf32>
    %c0_7 = arith.constant 0 : index
    %c0_8 = arith.constant 0 : index
    %9 = vector.load %arg5[%c0_7, %c0_8] : memref<1x128xf32, #tpu.memory_space<vmem>>, vector<1x128xf32>
    %cst_9 = arith.constant dense<0.000000e+00> : vector<1x128xf32>
    %10 = tpu.matmul %9, %8, %cst_9 {dimension_numbers = #tpu.dot_dimension_numbers<[1], [0], [0], [1], [0, 0, 1, 1], [], []>} : vector<1x128xf32>, vector<128x128xf32>, vector<1x128xf32> -> vector<1x128xf32>
    %c0_10 = arith.constant 0 : index
    %c0_11 = arith.constant 0 : index
    %11 = vector.load %arg6[%c0_10, %c0_11] : memref<1x1xf32, #tpu.memory_space<vmem>>, vector<1x1xf32>
    %12 = vector.broadcast %11 : vector<1x1xf32> to vector<1x128xf32>
    %13 = arith.addf %10, %12 : vector<1x128xf32>
    %c128_i32 = arith.constant 128 : i32
    %14 = arith.muli %arg1, %c128_i32 : i32
    %15 = tpu.assume_multiple %14, 128 : i32
    %c0_12 = arith.constant 0 : index
    %16 = arith.index_cast %15 : i32 to index
    %17 = vector.load %arg8[%c0_12, %16] : memref<1x256xf32, #tpu.memory_space<vmem>>, vector<1x128xf32>
    tpu.vector_store %arg8[%c0_12, %16], %13 {strides = array<i32>} : memref<1x256xf32, #tpu.memory_space<vmem>>, vector<1x128xf32>,
    %c1_i32 = arith.constant 1 : i32
    %18 = arith.cmpi eq, %arg1, %c1_i32 : i32
    %19 = arith.extui %18 : i1 to i32
    %c0_i32 = arith.constant 0 : i32
    %20 = arith.cmpi ne, %19, %c0_i32 : i32
    scf.if %20 {
      %c0_13 = arith.constant 0 : index
      %c0_14 = arith.constant 0 : index
      %21 = vector.load %arg8[%c0_13, %c0_14] : memref<1x256xf32, #tpu.memory_space<vmem>>, vector<1x256xf32>
      %22 = math.absf %21 : vector<1x256xf32>
      %cst_15 = arith.constant dense<0xFF800000> : vector<1xf32>
      %23 = vector.multi_reduction <maximumf>, %22, %cst_15 [1] : vector<1x256xf32> to vector<1xf32>
      %24 = vector.shape_cast %23 : vector<1xf32> to vector<1x1xf32>
      %cst_16 = arith.constant 0.000000e+00 : f32
      %25 = vector.broadcast %cst_16 : f32 to vector<1x1xf32>
      %cst_17 = arith.constant 2.500000e+01 : f32
      %c0_i32_18 = arith.constant 0 : i32
      %26 = arith.addf %25, %24 : vector<1x1xf32>
      %cst_19 = arith.constant 5.000000e-01 : f32
      %27 = vector.broadcast %cst_19 : f32 to vector<1x1xf32>
      %28 = arith.mulf %27, %26 : vector<1x1xf32>
      %29 = vector.broadcast %28 : vector<1x1xf32> to vector<1x256xf32>
      %30 = arith.cmpf ogt, %22, %29 : vector<1x256xf32>
      %31 = arith.extui %30 : vector<1x256xi1> to vector<1x256xi32>
      %32 = arith.sitofp %31 : vector<1x256xi32> to vector<1x256xf32>
      %cst_20 = arith.constant dense<0.000000e+00> : vector<1xf32>
      %33 = vector.multi_reduction <add>, %32, %cst_20 [1] : vector<1x256xf32> to vector<1xf32>
      %34 = vector.shape_cast %33 : vector<1xf32> to vector<1x1xf32>
      %35 = vector.broadcast %cst_17 : f32 to vector<1x1xf32>
      %36 = arith.cmpf oge, %34, %35 : vector<1x1xf32>
      %37 = arith.select %36, %28, %25 : vector<1x1xi1>, vector<1x1xf32>
      %38 = arith.select %36, %24, %28 : vector<1x1xi1>, vector<1x1xf32>
      %c1_i32_21 = arith.constant 1 : i32
      %39 = arith.addf %37, %38 : vector<1x1xf32>
      %cst_22 = arith.constant 5.000000e-01 : f32
      %40 = vector.broadcast %cst_22 : f32 to vector<1x1xf32>
      %41 = arith.mulf %40, %39 : vector<1x1xf32>
      %42 = vector.broadcast %41 : vector<1x1xf32> to vector<1x256xf32>
      %43 = arith.cmpf ogt, %22, %42 : vector<1x256xf32>
      %44 = arith.extui %43 : vector<1x256xi1> to vector<1x256xi32>
      %45 = arith.sitofp %44 : vector<1x256xi32> to vector<1x256xf32>
      %cst_23 = arith.constant dense<0.000000e+00> : vector<1xf32>
      %46 = vector.multi_reduction <add>, %45, %cst_23 [1] : vector<1x256xf32> to vector<1xf32>
      %47 = vector.shape_cast %46 : vector<1xf32> to vector<1x1xf32>
      %48 = vector.broadcast %cst_17 : f32 to vector<1x1xf32>
      %49 = arith.cmpf oge, %47, %48 : vector<1x1xf32>
      %50 = arith.select %49, %41, %37 : vector<1x1xi1>, vector<1x1xf32>
      %51 = arith.select %49, %38, %41 : vector<1x1xi1>, vector<1x1xf32>
      %c2_i32 = arith.constant 2 : i32
      %52 = arith.addf %50, %51 : vector<1x1xf32>
      %cst_24 = arith.constant 5.000000e-01 : f32
      %53 = vector.broadcast %cst_24 : f32 to vector<1x1xf32>
      %54 = arith.mulf %53, %52 : vector<1x1xf32>
      %55 = vector.broadcast %54 : vector<1x1xf32> to vector<1x256xf32>
      %56 = arith.cmpf ogt, %22, %55 : vector<1x256xf32>
      %57 = arith.extui %56 : vector<1x256xi1> to vector<1x256xi32>
      %58 = arith.sitofp %57 : vector<1x256xi32> to vector<1x256xf32>
      %cst_25 = arith.constant dense<0.000000e+00> : vector<1xf32>
      %59 = vector.multi_reduction <add>, %58, %cst_25 [1] : vector<1x256xf32> to vector<1xf32>
      %60 = vector.shape_cast %59 : vector<1xf32> to vector<1x1xf32>
      %61 = vector.broadcast %cst_17 : f32 to vector<1x1xf32>
      %62 = arith.cmpf oge, %60, %61 : vector<1x1xf32>
      %63 = arith.select %62, %54, %50 : vector<1x1xi1>, vector<1x1xf32>
      %64 = arith.select %62, %51, %54 : vector<1x1xi1>, vector<1x1xf32>
      %c3_i32 = arith.constant 3 : i32
      %65 = arith.addf %63, %64 : vector<1x1xf32>
      %cst_26 = arith.constant 5.000000e-01 : f32
      %66 = vector.broadcast %cst_26 : f32 to vector<1x1xf32>
      %67 = arith.mulf %66, %65 : vector<1x1xf32>
      %68 = vector.broadcast %67 : vector<1x1xf32> to vector<1x256xf32>
      %69 = arith.cmpf ogt, %22, %68 : vector<1x256xf32>
      %70 = arith.extui %69 : vector<1x256xi1> to vector<1x256xi32>
      %71 = arith.sitofp %70 : vector<1x256xi32> to vector<1x256xf32>
      %cst_27 = arith.constant dense<0.000000e+00> : vector<1xf32>
      %72 = vector.multi_reduction <add>, %71, %cst_27 [1] : vector<1x256xf32> to vector<1xf32>
      %73 = vector.shape_cast %72 : vector<1xf32> to vector<1x1xf32>
      %74 = vector.broadcast %cst_17 : f32 to vector<1x1xf32>
      %75 = arith.cmpf oge, %73, %74 : vector<1x1xf32>
      %76 = arith.select %75, %67, %63 : vector<1x1xi1>, vector<1x1xf32>
      %77 = arith.select %75, %64, %67 : vector<1x1xi1>, vector<1x1xf32>
      %c4_i32 = arith.constant 4 : i32
      %78 = arith.addf %76, %77 : vector<1x1xf32>
      %cst_28 = arith.constant 5.000000e-01 : f32
      %79 = vector.broadcast %cst_28 : f32 to vector<1x1xf32>
      %80 = arith.mulf %79, %78 : vector<1x1xf32>
      %81 = vector.broadcast %80 : vector<1x1xf32> to vector<1x256xf32>
      %82 = arith.cmpf ogt, %22, %81 : vector<1x256xf32>
      %83 = arith.extui %82 : vector<1x256xi1> to vector<1x256xi32>
      %84 = arith.sitofp %83 : vector<1x256xi32> to vector<1x256xf32>
      %cst_29 = arith.constant dense<0.000000e+00> : vector<1xf32>
      %85 = vector.multi_reduction <add>, %84, %cst_29 [1] : vector<1x256xf32> to vector<1xf32>
      %86 = vector.shape_cast %85 : vector<1xf32> to vector<1x1xf32>
      %87 = vector.broadcast %cst_17 : f32 to vector<1x1xf32>
      %88 = arith.cmpf oge, %86, %87 : vector<1x1xf32>
      %89 = arith.select %88, %80, %76 : vector<1x1xi1>, vector<1x1xf32>
      %90 = arith.select %88, %77, %80 : vector<1x1xi1>, vector<1x1xf32>
      %c5_i32 = arith.constant 5 : i32
      %91 = arith.addf %89, %90 : vector<1x1xf32>
      %cst_30 = arith.constant 5.000000e-01 : f32
      %92 = vector.broadcast %cst_30 : f32 to vector<1x1xf32>
      %93 = arith.mulf %92, %91 : vector<1x1xf32>
      %94 = vector.broadcast %93 : vector<1x1xf32> to vector<1x256xf32>
      %95 = arith.cmpf ogt, %22, %94 : vector<1x256xf32>
      %96 = arith.extui %95 : vector<1x256xi1> to vector<1x256xi32>
      %97 = arith.sitofp %96 : vector<1x256xi32> to vector<1x256xf32>
      %cst_31 = arith.constant dense<0.000000e+00> : vector<1xf32>
      %98 = vector.multi_reduction <add>, %97, %cst_31 [1] : vector<1x256xf32> to vector<1xf32>
      %99 = vector.shape_cast %98 : vector<1xf32> to vector<1x1xf32>
      %100 = vector.broadcast %cst_17 : f32 to vector<1x1xf32>
      %101 = arith.cmpf oge, %99, %100 : vector<1x1xf32>
      %102 = arith.select %101, %93, %89 : vector<1x1xi1>, vector<1x1xf32>
      %103 = arith.select %101, %90, %93 : vector<1x1xi1>, vector<1x1xf32>
      %c6_i32 = arith.constant 6 : i32
      %104 = arith.addf %102, %103 : vector<1x1xf32>
      %cst_32 = arith.constant 5.000000e-01 : f32
      %105 = vector.broadcast %cst_32 : f32 to vector<1x1xf32>
      %106 = arith.mulf %105, %104 : vector<1x1xf32>
      %107 = vector.broadcast %106 : vector<1x1xf32> to vector<1x256xf32>
      %108 = arith.cmpf ogt, %22, %107 : vector<1x256xf32>
      %109 = arith.extui %108 : vector<1x256xi1> to vector<1x256xi32>
      %110 = arith.sitofp %109 : vector<1x256xi32> to vector<1x256xf32>
      %cst_33 = arith.constant dense<0.000000e+00> : vector<1xf32>
      %111 = vector.multi_reduction <add>, %110, %cst_33 [1] : vector<1x256xf32> to vector<1xf32>
      %112 = vector.shape_cast %111 : vector<1xf32> to vector<1x1xf32>
      %113 = vector.broadcast %cst_17 : f32 to vector<1x1xf32>
      %114 = arith.cmpf oge, %112, %113 : vector<1x1xf32>
      %115 = arith.select %114, %106, %102 : vector<1x1xi1>, vector<1x1xf32>
      %116 = arith.select %114, %103, %106 : vector<1x1xi1>, vector<1x1xf32>
      %c7_i32 = arith.constant 7 : i32
      %117 = arith.addf %115, %116 : vector<1x1xf32>
      %cst_34 = arith.constant 5.000000e-01 : f32
      %118 = vector.broadcast %cst_34 : f32 to vector<1x1xf32>
      %119 = arith.mulf %118, %117 : vector<1x1xf32>
      %120 = vector.broadcast %119 : vector<1x1xf32> to vector<1x256xf32>
      %121 = arith.cmpf ogt, %22, %120 : vector<1x256xf32>
      %122 = arith.extui %121 : vector<1x256xi1> to vector<1x256xi32>
      %123 = arith.sitofp %122 : vector<1x256xi32> to vector<1x256xf32>
      %cst_35 = arith.constant dense<0.000000e+00> : vector<1xf32>
      %124 = vector.multi_reduction <add>, %123, %cst_35 [1] : vector<1x256xf32> to vector<1xf32>
      %125 = vector.shape_cast %124 : vector<1xf32> to vector<1x1xf32>
      %126 = vector.broadcast %cst_17 : f32 to vector<1x1xf32>
      %127 = arith.cmpf oge, %125, %126 : vector<1x1xf32>
      %128 = arith.select %127, %119, %115 : vector<1x1xi1>, vector<1x1xf32>
      %129 = arith.select %127, %116, %119 : vector<1x1xi1>, vector<1x1xf32>
      %c8_i32 = arith.constant 8 : i32
      %130 = arith.addf %128, %129 : vector<1x1xf32>
      %cst_36 = arith.constant 5.000000e-01 : f32
      %131 = vector.broadcast %cst_36 : f32 to vector<1x1xf32>
      %132 = arith.mulf %131, %130 : vector<1x1xf32>
      %133 = vector.broadcast %132 : vector<1x1xf32> to vector<1x256xf32>
      %134 = arith.cmpf ogt, %22, %133 : vector<1x256xf32>
      %135 = arith.extui %134 : vector<1x256xi1> to vector<1x256xi32>
      %136 = arith.sitofp %135 : vector<1x256xi32> to vector<1x256xf32>
      %cst_37 = arith.constant dense<0.000000e+00> : vector<1xf32>
      %137 = vector.multi_reduction <add>, %136, %cst_37 [1] : vector<1x256xf32> to vector<1xf32>
      %138 = vector.shape_cast %137 : vector<1xf32> to vector<1x1xf32>
      %139 = vector.broadcast %cst_17 : f32 to vector<1x1xf32>
      %140 = arith.cmpf oge, %138, %139 : vector<1x1xf32>
      %141 = arith.select %140, %132, %128 : vector<1x1xi1>, vector<1x1xf32>
      %142 = arith.select %140, %129, %132 : vector<1x1xi1>, vector<1x1xf32>
      %c9_i32 = arith.constant 9 : i32
      %143 = arith.addf %141, %142 : vector<1x1xf32>
      %cst_38 = arith.constant 5.000000e-01 : f32
      %144 = vector.broadcast %cst_38 : f32 to vector<1x1xf32>
      %145 = arith.mulf %144, %143 : vector<1x1xf32>
      %146 = vector.broadcast %145 : vector<1x1xf32> to vector<1x256xf32>
      %147 = arith.cmpf ogt, %22, %146 : vector<1x256xf32>
      %148 = arith.extui %147 : vector<1x256xi1> to vector<1x256xi32>
      %149 = arith.sitofp %148 : vector<1x256xi32> to vector<1x256xf32>
      %cst_39 = arith.constant dense<0.000000e+00> : vector<1xf32>
      %150 = vector.multi_reduction <add>, %149, %cst_39 [1] : vector<1x256xf32> to vector<1xf32>
      %151 = vector.shape_cast %150 : vector<1xf32> to vector<1x1xf32>
      %152 = vector.broadcast %cst_17 : f32 to vector<1x1xf32>
      %153 = arith.cmpf oge, %151, %152 : vector<1x1xf32>
      %154 = arith.select %153, %145, %141 : vector<1x1xi1>, vector<1x1xf32>
      %155 = arith.select %153, %142, %145 : vector<1x1xi1>, vector<1x1xf32>
      %c10_i32 = arith.constant 10 : i32
      %156 = arith.addf %154, %155 : vector<1x1xf32>
      %cst_40 = arith.constant 5.000000e-01 : f32
      %157 = vector.broadcast %cst_40 : f32 to vector<1x1xf32>
      %158 = arith.mulf %157, %156 : vector<1x1xf32>
      %159 = vector.broadcast %158 : vector<1x1xf32> to vector<1x256xf32>
      %160 = arith.cmpf ogt, %22, %159 : vector<1x256xf32>
      %161 = arith.extui %160 : vector<1x256xi1> to vector<1x256xi32>
      %162 = arith.sitofp %161 : vector<1x256xi32> to vector<1x256xf32>
      %cst_41 = arith.constant dense<0.000000e+00> : vector<1xf32>
      %163 = vector.multi_reduction <add>, %162, %cst_41 [1] : vector<1x256xf32> to vector<1xf32>
      %164 = vector.shape_cast %163 : vector<1xf32> to vector<1x1xf32>
      %165 = vector.broadcast %cst_17 : f32 to vector<1x1xf32>
      %166 = arith.cmpf oge, %164, %165 : vector<1x1xf32>
      %167 = arith.select %166, %158, %154 : vector<1x1xi1>, vector<1x1xf32>
      %168 = arith.select %166, %155, %158 : vector<1x1xi1>, vector<1x1xf32>
      %c11_i32 = arith.constant 11 : i32
      %169 = arith.addf %167, %168 : vector<1x1xf32>
      %cst_42 = arith.constant 5.000000e-01 : f32
      %170 = vector.broadcast %cst_42 : f32 to vector<1x1xf32>
      %171 = arith.mulf %170, %169 : vector<1x1xf32>
      %172 = vector.broadcast %171 : vector<1x1xf32> to vector<1x256xf32>
      %173 = arith.cmpf ogt, %22, %172 : vector<1x256xf32>
      %174 = arith.extui %173 : vector<1x256xi1> to vector<1x256xi32>
      %175 = arith.sitofp %174 : vector<1x256xi32> to vector<1x256xf32>
      %cst_43 = arith.constant dense<0.000000e+00> : vector<1xf32>
      %176 = vector.multi_reduction <add>, %175, %cst_43 [1] : vector<1x256xf32> to vector<1xf32>
      %177 = vector.shape_cast %176 : vector<1xf32> to vector<1x1xf32>
      %178 = vector.broadcast %cst_17 : f32 to vector<1x1xf32>
      %179 = arith.cmpf oge, %177, %178 : vector<1x1xf32>
      %180 = arith.select %179, %171, %167 : vector<1x1xi1>, vector<1x1xf32>
      %181 = arith.select %179, %168, %171 : vector<1x1xi1>, vector<1x1xf32>
      %c12_i32 = arith.constant 12 : i32
      %182 = arith.addf %180, %181 : vector<1x1xf32>
      %cst_44 = arith.constant 5.000000e-01 : f32
      %183 = vector.broadcast %cst_44 : f32 to vector<1x1xf32>
      %184 = arith.mulf %183, %182 : vector<1x1xf32>
      %185 = vector.broadcast %184 : vector<1x1xf32> to vector<1x256xf32>
      %186 = arith.cmpf ogt, %22, %185 : vector<1x256xf32>
      %187 = arith.extui %186 : vector<1x256xi1> to vector<1x256xi32>
      %188 = arith.sitofp %187 : vector<1x256xi32> to vector<1x256xf32>
      %cst_45 = arith.constant dense<0.000000e+00> : vector<1xf32>
      %189 = vector.multi_reduction <add>, %188, %cst_45 [1] : vector<1x256xf32> to vector<1xf32>
      %190 = vector.shape_cast %189 : vector<1xf32> to vector<1x1xf32>
      %191 = vector.broadcast %cst_17 : f32 to vector<1x1xf32>
      %192 = arith.cmpf oge, %190, %191 : vector<1x1xf32>
      %193 = arith.select %192, %184, %180 : vector<1x1xi1>, vector<1x1xf32>
      %194 = arith.select %192, %181, %184 : vector<1x1xi1>, vector<1x1xf32>
      %c13_i32 = arith.constant 13 : i32
      %195 = arith.addf %193, %194 : vector<1x1xf32>
      %cst_46 = arith.constant 5.000000e-01 : f32
      %196 = vector.broadcast %cst_46 : f32 to vector<1x1xf32>
      %197 = arith.mulf %196, %195 : vector<1x1xf32>
      %198 = vector.broadcast %197 : vector<1x1xf32> to vector<1x256xf32>
      %199 = arith.cmpf ogt, %22, %198 : vector<1x256xf32>
      %200 = arith.extui %199 : vector<1x256xi1> to vector<1x256xi32>
      %201 = arith.sitofp %200 : vector<1x256xi32> to vector<1x256xf32>
      %cst_47 = arith.constant dense<0.000000e+00> : vector<1xf32>
      %202 = vector.multi_reduction <add>, %201, %cst_47 [1] : vector<1x256xf32> to vector<1xf32>
      %203 = vector.shape_cast %202 : vector<1xf32> to vector<1x1xf32>
      %204 = vector.broadcast %cst_17 : f32 to vector<1x1xf32>
      %205 = arith.cmpf oge, %203, %204 : vector<1x1xf32>
      %206 = arith.select %205, %197, %193 : vector<1x1xi1>, vector<1x1xf32>
      %207 = arith.select %205, %194, %197 : vector<1x1xi1>, vector<1x1xf32>
      %c14_i32 = arith.constant 14 : i32
      %208 = arith.addf %206, %207 : vector<1x1xf32>
      %cst_48 = arith.constant 5.000000e-01 : f32
      %209 = vector.broadcast %cst_48 : f32 to vector<1x1xf32>
      %210 = arith.mulf %209, %208 : vector<1x1xf32>
      %211 = vector.broadcast %210 : vector<1x1xf32> to vector<1x256xf32>
      %212 = arith.cmpf ogt, %22, %211 : vector<1x256xf32>
      %213 = arith.extui %212 : vector<1x256xi1> to vector<1x256xi32>
      %214 = arith.sitofp %213 : vector<1x256xi32> to vector<1x256xf32>
      %cst_49 = arith.constant dense<0.000000e+00> : vector<1xf32>
      %215 = vector.multi_reduction <add>, %214, %cst_49 [1] : vector<1x256xf32> to vector<1xf32>
      %216 = vector.shape_cast %215 : vector<1xf32> to vector<1x1xf32>
      %217 = vector.broadcast %cst_17 : f32 to vector<1x1xf32>
      %218 = arith.cmpf oge, %216, %217 : vector<1x1xf32>
      %219 = arith.select %218, %210, %206 : vector<1x1xi1>, vector<1x1xf32>
      %220 = arith.select %218, %207, %210 : vector<1x1xi1>, vector<1x1xf32>
      %c15_i32 = arith.constant 15 : i32
      %221 = arith.addf %219, %220 : vector<1x1xf32>
      %cst_50 = arith.constant 5.000000e-01 : f32
      %222 = vector.broadcast %cst_50 : f32 to vector<1x1xf32>
      %223 = arith.mulf %222, %221 : vector<1x1xf32>
      %224 = vector.broadcast %223 : vector<1x1xf32> to vector<1x256xf32>
      %225 = arith.cmpf ogt, %22, %224 : vector<1x256xf32>
      %226 = arith.extui %225 : vector<1x256xi1> to vector<1x256xi32>
      %227 = arith.sitofp %226 : vector<1x256xi32> to vector<1x256xf32>
      %cst_51 = arith.constant dense<0.000000e+00> : vector<1xf32>
      %228 = vector.multi_reduction <add>, %227, %cst_51 [1] : vector<1x256xf32> to vector<1xf32>
      %229 = vector.shape_cast %228 : vector<1xf32> to vector<1x1xf32>
      %230 = vector.broadcast %cst_17 : f32 to vector<1x1xf32>
      %231 = arith.cmpf oge, %229, %230 : vector<1x1xf32>
      %232 = arith.select %231, %223, %219 : vector<1x1xi1>, vector<1x1xf32>
      %233 = arith.select %231, %220, %223 : vector<1x1xi1>, vector<1x1xf32>
      %c16_i32 = arith.constant 16 : i32
      %234 = arith.addf %232, %233 : vector<1x1xf32>
      %cst_52 = arith.constant 5.000000e-01 : f32
      %235 = vector.broadcast %cst_52 : f32 to vector<1x1xf32>
      %236 = arith.mulf %235, %234 : vector<1x1xf32>
      %237 = vector.broadcast %236 : vector<1x1xf32> to vector<1x256xf32>
      %238 = arith.cmpf ogt, %22, %237 : vector<1x256xf32>
      %239 = arith.extui %238 : vector<1x256xi1> to vector<1x256xi32>
      %240 = arith.sitofp %239 : vector<1x256xi32> to vector<1x256xf32>
      %cst_53 = arith.constant dense<0.000000e+00> : vector<1xf32>
      %241 = vector.multi_reduction <add>, %240, %cst_53 [1] : vector<1x256xf32> to vector<1xf32>
      %242 = vector.shape_cast %241 : vector<1xf32> to vector<1x1xf32>
      %243 = vector.broadcast %cst_17 : f32 to vector<1x1xf32>
      %244 = arith.cmpf oge, %242, %243 : vector<1x1xf32>
      %245 = arith.select %244, %236, %232 : vector<1x1xi1>, vector<1x1xf32>
      %246 = arith.select %244, %233, %236 : vector<1x1xi1>, vector<1x1xf32>
      %c17_i32 = arith.constant 17 : i32
      %247 = arith.addf %245, %246 : vector<1x1xf32>
      %cst_54 = arith.constant 5.000000e-01 : f32
      %248 = vector.broadcast %cst_54 : f32 to vector<1x1xf32>
      %249 = arith.mulf %248, %247 : vector<1x1xf32>
      %250 = vector.broadcast %249 : vector<1x1xf32> to vector<1x256xf32>
      %251 = arith.cmpf ogt, %22, %250 : vector<1x256xf32>
      %252 = arith.extui %251 : vector<1x256xi1> to vector<1x256xi32>
      %253 = arith.sitofp %252 : vector<1x256xi32> to vector<1x256xf32>
      %cst_55 = arith.constant dense<0.000000e+00> : vector<1xf32>
      %254 = vector.multi_reduction <add>, %253, %cst_55 [1] : vector<1x256xf32> to vector<1xf32>
      %255 = vector.shape_cast %254 : vector<1xf32> to vector<1x1xf32>
      %256 = vector.broadcast %cst_17 : f32 to vector<1x1xf32>
      %257 = arith.cmpf oge, %255, %256 : vector<1x1xf32>
      %258 = arith.select %257, %249, %245 : vector<1x1xi1>, vector<1x1xf32>
      %259 = arith.select %257, %246, %249 : vector<1x1xi1>, vector<1x1xf32>
      %260 = vector.broadcast %259 : vector<1x1xf32> to vector<1x256xf32>
      %261 = arith.cmpf ogt, %22, %260 : vector<1x256xf32>
      %262 = arith.extui %261 : vector<1x256xi1> to vector<1x256xi32>
      %263 = arith.sitofp %262 : vector<1x256xi32> to vector<1x256xf32>
      %264 = arith.mulf %22, %263 : vector<1x256xf32>
      %cst_56 = arith.constant dense<0.000000e+00> : vector<1xf32>
      %265 = vector.multi_reduction <add>, %264, %cst_56 [1] : vector<1x256xf32> to vector<1xf32>
      %266 = vector.shape_cast %265 : vector<1xf32> to vector<1x1xf32>
      %cst_57 = arith.constant dense<0.000000e+00> : vector<1xf32>
      %267 = vector.multi_reduction <add>, %263, %cst_57 [1] : vector<1x256xf32> to vector<1xf32>
      %268 = vector.shape_cast %267 : vector<1xf32> to vector<1x1xf32>
      %cst_58 = arith.constant 2.500000e+01 : f32
      %269 = vector.broadcast %cst_58 : f32 to vector<1x1xf32>
      %270 = arith.subf %269, %268 : vector<1x1xf32>
      %271 = arith.mulf %270, %259 : vector<1x1xf32>
      %272 = arith.addf %266, %271 : vector<1x1xf32>
      %cst_59 = arith.constant 4.000000e-02 : f32
      %273 = vector.broadcast %cst_59 : f32 to vector<1x1xf32>
      %274 = arith.mulf %272, %273 : vector<1x1xf32>
      %275 = vector.shape_cast %274 : vector<1x1xf32> to vector<1x1x1xf32>
      %c0_60 = arith.constant 0 : index
      %c0_61 = arith.constant 0 : index
      %c0_62 = arith.constant 0 : index
      %276 = vector.load %arg7[%c0_60, %c0_61, %c0_62] : memref<1x1x1xf32, #tpu.memory_space<vmem>>, vector<1x1x1xf32>
      tpu.vector_store %arg7[%c0_60, %c0_61, %c0_62], %275 {strides = array<i32>} : memref<1x1x1xf32, #tpu.memory_space<vmem>>, vector<1x1x1xf32>,
    } else {
    }
    return
  }
  func.func @transform_0(%arg0: i32, %arg1: i32) -> (i32, i32, i32) {
    %c0_i32 = arith.constant 0 : i32
    %c0_i32_0 = arith.constant 0 : i32
    return %arg0, %c0_i32, %arg1 : i32, i32, i32
  }
  func.func @transform_1(%arg0: i32, %arg1: i32) -> (i32, i32) {
    %c0_i32 = arith.constant 0 : i32
    %c0_i32_0 = arith.constant 0 : i32
    %c0_i32_1 = arith.constant 0 : i32
    return %c0_i32, %c0_i32_0 : i32, i32
  }
  func.func @transform_2(%arg0: i32, %arg1: i32) -> (i32, i32) {
    %c0_i32 = arith.constant 0 : i32
    %c0_i32_0 = arith.constant 0 : i32
    %c0_i32_1 = arith.constant 0 : i32
    return %c0_i32, %c0_i32_0 : i32, i32
  }
  func.func @transform_3(%arg0: i32, %arg1: i32) -> (i32, i32) {
    %c0_i32 = arith.constant 0 : i32
    %c0_i32_0 = arith.constant 0 : i32
    %c0_i32_1 = arith.constant 0 : i32
    return %c0_i32, %c0_i32_0 : i32, i32
  }
  func.func @transform_4(%arg0: i32, %arg1: i32) -> (i32, i32) {
    %c0_i32 = arith.constant 0 : i32
    %c0_i32_0 = arith.constant 0 : i32
    %c0_i32_1 = arith.constant 0 : i32
    return %c0_i32, %c0_i32_0 : i32, i32
  }
  func.func @transform_5(%arg0: i32, %arg1: i32) -> (i32, i32, i32) {
    %c0_i32 = arith.constant 0 : i32
    %c0_i32_0 = arith.constant 0 : i32
    %c0_i32_1 = arith.constant 0 : i32
    return %arg0, %c0_i32, %c0_i32_0 : i32, i32, i32
  }
}

</mosaic_0001>

<llo_original>
// kernel: tpu_custom_call.1
$region0: #{tpu_custom_call.1}
  #allocation0 [shape = 'u32[]', space=smem, size = 0x4, offset = 0x4, fixed_abs, tag = 'smem constant byte address 0x4 - core index']
  #allocation1 [shape = 'u32[144,128]{1,0:T(1,128)}', space=vmem, size = 0x12000, scoped, tag = 'internal scratch']
  #allocation2 [shape = 'f32[1,256]{1,0:T(1,128)}', space=vmem, size = 0x400, scoped, tag = 'scratch operand']
  #allocation3 [shape = 'f32[1,1]{1,0:T(1,128)S(1)}', space=vmem, size = 0x200, scoped, tag = 'scoped memory for tpu_custom_call.1']
  %s0 = inlined_call_operand.vmem [shape: f32[2,3,256], index: 0, kind: input, shape index: {}]
  %s1 = inlined_call_operand.vmem [shape: f32[128,3], index: 1, kind: input, shape index: {}]
  %s2 = inlined_call_operand.vmem [shape: f32[128,1], index: 2, kind: input, shape index: {}]
  %s3 = inlined_call_operand.vmem [shape: f32[1,128], index: 3, kind: input, shape index: {}]
  %s4 = inlined_call_operand.<no memory space> [shape: f32[1,1], index: 4, kind: input, shape index: {}]
  %s5 = inlined_call_operand.vmem [shape: f32[2,1,1], index: 5, kind: output, shape index: {}]
  %s6 = sld [smem:[#allocation0]]
  $region57: #{tpu_custom_call.1} parent=0
    _
  %s8 = ssub.s32 1, %s6
  %s9 = scalar_select 0, %s8, %s6
  %v10 = vstv %s4
  %11 = vst [vmem:[#allocation3] sm:$0x1] %v10
  loop: start=0, step=1, limit=6
  $region2: #{tpu_custom_call.1} parent=0 // loop_pre_header
    _
  $region3: #{tpu_custom_call.1} parent=0 // loop_header
    %s13 = sphi 0, %s17
    %p14 = scmp.ge.s32.totalorder %s13, 6
    %s20 = sphi 0, %s32
    %s21 = sphi 0, %s28
    %s22 = sphi 0, %s20
    %s23 = sphi 0, %s21
    %s24 = sphi 0, %s22
    %s25 = sphi 0, %s23
    %s37 = sphi 0, %s39
    %s40 = sphi 0, %s37
    %s41 = sphi 0, %s40
    %s57 = sphi 0, %s41
    %s61 = sphi 0, %s61
    %s63 = sphi 0, %s61
    %s64 = sphi 0, %s63
    %s78 = sphi 0, %s64
    %s82 = sphi 0, %s82
    %s84 = sphi 0, %s82
    %s85 = sphi 0, %s84
    %s99 = sphi 0, %s85
    %s103 = sphi 0, %s103
    %s105 = sphi 0, %s103
    %s106 = sphi 0, %s105
    %s120 = sphi 0, %s106
    %s124 = sphi 0, %s124
    %s126 = sphi 0, %s124
    %s127 = sphi 0, %s126
    %s141 = sphi 0, %s127
    %s147 = sphi 0, %s149
    %s150 = sphi 0, %s147
    %s151 = sphi 0, %s150
    %s167 = sphi 0, %s151
  $region4: #{tpu_custom_call.1} parent=0 // loop_header_branch
    %16 = sbr.rel (%p14) target = $region8
  $region5: #{tpu_custom_call.1} parent=0 // loop_body
    %s18 = ssub.s32 %s13, 1
    %s19 = ssub.s32 %s13, 2
    %s26 = sadd.s32 1, %s21
    %p27 = scmp.ge.s32.totalorder %s26, 2
    %s28 = scalar_select %p27, 0, %s26
    %s29 = sadd.s32 1, %s20
    %s30 = scalar_select %p27, %s29, %s20
    %p31 = scmp.ge.s32.totalorder %s30, 2
    %s32 = scalar_select %p31, 0, %s30
    %s33 = ssub.s32 %s20, %s32
    %s34 = ssub.s32 %s21, %s28
    %s35 = sor.u32 %s33, %s34
    %p36 = scmp.eq.s32.totalorder %s35, 0
    %s38 = sadd.s32 %s37, 1
    %s39 = scalar_select %p36, %s37, %s38
    %p42 = pneg %p36
    %p43 = scmp.eq.s32.totalorder %s13, 3
    %p44 = por %p42, %p43
    %p45 = scmp.ne.s32.totalorder %s37, %s40
    %p46 = scmp.eq.s32.totalorder %s13, 0
    %p47 = por %p45, %p46
    %p48 = scmp.ne.s32.totalorder %s37, %s40
    %p49 = scmp.eq.s32.totalorder %s18, 3
    %p50 = por %p48, %p49
    %p51 = scmp.ne.s32.totalorder %s40, %s41
    %p52 = scmp.eq.s32.totalorder %s18, 0
    %p53 = por %p51, %p52
    %p54 = scmp.ne.s32.totalorder %s40, %s41
    %p55 = scmp.eq.s32.totalorder %s19, 3
    %p56 = por %p54, %p55
    %p58 = scmp.ne.s32.totalorder %s41, %s57
    %p59 = scmp.eq.s32.totalorder %s19, 0
    %p60 = por %p58, %p59
    %s62 = sadd.s32 %s61, 1
    %p65 = scmp.eq.s32.totalorder %s13, 3
    %p66 = scmp.ne.s32.totalorder %s61, %s63
    %p67 = scmp.eq.s32.totalorder %s13, 0
    %p68 = por %p66, %p67
    %p69 = scmp.ne.s32.totalorder %s61, %s63
    %p70 = scmp.eq.s32.totalorder %s18, 3
    %p71 = por %p69, %p70
    %p72 = scmp.ne.s32.totalorder %s63, %s64
    %p73 = scmp.eq.s32.totalorder %s18, 0
    %p74 = por %p72, %p73
    %p75 = scmp.ne.s32.totalorder %s63, %s64
    %p76 = scmp.eq.s32.totalorder %s19, 3
    %p77 = por %p75, %p76
    %p79 = scmp.ne.s32.totalorder %s64, %s78
    %p80 = scmp.eq.s32.totalorder %s19, 0
    %p81 = por %p79, %p80
    %s83 = sadd.s32 %s82, 1
    %p86 = scmp.eq.s32.totalorder %s13, 3
    %p87 = scmp.ne.s32.totalorder %s82, %s84
    %p88 = scmp.eq.s32.totalorder %s13, 0
    %p89 = por %p87, %p88
    %p90 = scmp.ne.s32.totalorder %s82, %s84
    %p91 = scmp.eq.s32.totalorder %s18, 3
    %p92 = por %p90, %p91
    %p93 = scmp.ne.s32.totalorder %s84, %s85
    %p94 = scmp.eq.s32.totalorder %s18, 0
    %p95 = por %p93, %p94
    %p96 = scmp.ne.s32.totalorder %s84, %s85
    %p97 = scmp.eq.s32.totalorder %s19, 3
    %p98 = por %p96, %p97
    %p100 = scmp.ne.s32.totalorder %s85, %s99
    %p101 = scmp.eq.s32.totalorder %s19, 0
    %p102 = por %p100, %p101
    %s104 = sadd.s32 %s103, 1
    %p107 = scmp.eq.s32.totalorder %s13, 3
    %p108 = scmp.ne.s32.totalorder %s103, %s105
    %p109 = scmp.eq.s32.totalorder %s13, 0
    %p110 = por %p108, %p109
    %p111 = scmp.ne.s32.totalorder %s103, %s105
    %p112 = scmp.eq.s32.totalorder %s18, 3
    %p113 = por %p111, %p112
    %p114 = scmp.ne.s32.totalorder %s105, %s106
    %p115 = scmp.eq.s32.totalorder %s18, 0
    %p116 = por %p114, %p115
    %p117 = scmp.ne.s32.totalorder %s105, %s106
    %p118 = scmp.eq.s32.totalorder %s19, 3
    %p119 = por %p117, %p118
    %p121 = scmp.ne.s32.totalorder %s106, %s120
    %p122 = scmp.eq.s32.totalorder %s19, 0
    %p123 = por %p121, %p122
    %s125 = sadd.s32 %s124, 1
    %p128 = scmp.eq.s32.totalorder %s13, 3
    %p129 = scmp.ne.s32.totalorder %s124, %s126
    %p130 = scmp.eq.s32.totalorder %s13, 0
    %p131 = por %p129, %p130
    %p132 = scmp.ne.s32.totalorder %s124, %s126
    %p133 = scmp.eq.s32.totalorder %s18, 3
    %p134 = por %p132, %p133
    %p135 = scmp.ne.s32.totalorder %s126, %s127
    %p136 = scmp.eq.s32.totalorder %s18, 0
    %p137 = por %p135, %p136
    %p138 = scmp.ne.s32.totalorder %s126, %s127
    %p139 = scmp.eq.s32.totalorder %s19, 3
    %p140 = por %p138, %p139
    %p142 = scmp.ne.s32.totalorder %s127, %s141
    %p143 = scmp.eq.s32.totalorder %s19, 0
    %p144 = por %p142, %p143
    %s145 = ssub.s32 %s20, %s32
    %p146 = scmp.eq.s32.totalorder %s145, 0
    %s148 = sadd.s32 %s147, 1
    %s149 = scalar_select %p146, %s147, %s148
    %p152 = pneg %p146
    %p153 = scmp.eq.s32.totalorder %s13, 3
    %p154 = por %p152, %p153
    %p155 = scmp.ne.s32.totalorder %s147, %s150
    %p156 = scmp.eq.s32.totalorder %s13, 0
    %p157 = por %p155, %p156
    %p158 = scmp.ne.s32.totalorder %s147, %s150
    %p159 = scmp.eq.s32.totalorder %s18, 3
    %p160 = por %p158, %p159
    %p161 = scmp.ne.s32.totalorder %s150, %s151
    %p162 = scmp.eq.s32.totalorder %s18, 0
    %p163 = por %p161, %p162
    %p164 = scmp.ne.s32.totalorder %s150, %s151
    %p165 = scmp.eq.s32.totalorder %s19, 3
    %p166 = por %p164, %p165
    %p168 = scmp.ne.s32.totalorder %s151, %s167
    %p169 = scmp.eq.s32.totalorder %s19, 0
    %p170 = por %p168, %p169
    %p171 = scmp.le.s32.totalorder 1, %s13
    %p172 = scmp.lt.s32.totalorder %s13, 5
    %p173 = pnand %p171, %p172
    %p174 = pneg %p173
    // Predicated region
    $region9: #{tpu_custom_call.1} parent=5 // pred_check
      _
    $region10: #{tpu_custom_call.1} parent=5 // pred_check_branch
      %176 = sbr.rel (%p173) target = $region12
    $region11: #{tpu_custom_call.1} parent=5 // pred_region
      %s177 = ssub.s32 %s13, 1
      // Predicated region
      $region13: #{tpu_custom_call.1} parent=11 // pred_check
        %p178 = pneg %p74
      $region14: #{tpu_custom_call.1} parent=11 // pred_check_branch
        %180 = sbr.rel (%p178) target = $region16
      $region15: #{tpu_custom_call.1} parent=11 // pred_region
        _
      $region16: #{tpu_custom_call.1} parent=11 // pred_fallthru
        _
      // Predicated region
      $region17: #{tpu_custom_call.1} parent=11 // pred_check
        %p181 = pneg %p95
      $region18: #{tpu_custom_call.1} parent=11 // pred_check_branch
        %183 = sbr.rel (%p181) target = $region20
      $region19: #{tpu_custom_call.1} parent=11 // pred_region
        _
      $region20: #{tpu_custom_call.1} parent=11 // pred_fallthru
        _
      // Predicated region
      $region21: #{tpu_custom_call.1} parent=11 // pred_check
        %p184 = pneg %p116
      $region22: #{tpu_custom_call.1} parent=11 // pred_check_branch
        %186 = sbr.rel (%p184) target = $region24
      $region23: #{tpu_custom_call.1} parent=11 // pred_region
        _
      $region24: #{tpu_custom_call.1} parent=11 // pred_fallthru
        _
      // Predicated region
      $region25: #{tpu_custom_call.1} parent=11 // pred_check
        %p187 = pneg %p137
      $region26: #{tpu_custom_call.1} parent=11 // pred_check_branch
        %189 = sbr.rel (%p187) target = $region28
      $region27: #{tpu_custom_call.1} parent=11 // pred_region
        _
      $region28: #{tpu_custom_call.1} parent=11 // pred_fallthru
        _
    $region12: #{tpu_custom_call.1} parent=5 // pred_fallthru
      _
    %p190 = scmp.lt.s32.totalorder %s13, 4
    // Predicated region
    $region29: #{tpu_custom_call.1} parent=5 // pred_check
      %p191 = pneg %p190
    $region30: #{tpu_custom_call.1} parent=5 // pred_check_branch
      %193 = sbr.rel (%p191) target = $region32
    $region31: #{tpu_custom_call.1} parent=5 // pred_region
      // Predicated region
      $region33: #{tpu_custom_call.1} parent=31 // pred_check
        %p194 = pneg %p47
      $region34: #{tpu_custom_call.1} parent=31 // pred_check_branch
        %196 = sbr.rel (%p194) target = $region36
      $region35: #{tpu_custom_call.1} parent=31 // pred_region
        %p197 = scmp.lt.s32.totalorder %s20, 1
        %s198 = scalar_select %p197, %s20, 1
        %p199 = scmp.lt.s32.totalorder %s21, 1
        %s200 = scalar_select %p199, %s21, 1
        %s201 = smul.addr %s198, 2
        %s202 = sadd.s32 %s200, %s201
        %s203 = smul.addr %s202, 4
        %s204 = scalar_lea.vmem %s0, %s203
      $region36: #{tpu_custom_call.1} parent=31 // pred_fallthru
        _
    $region32: #{tpu_custom_call.1} parent=5 // pred_fallthru
      _
    %p205 = scmp.le.s32.totalorder 1, %s13
    %p206 = scmp.lt.s32.totalorder %s13, 5
    %p207 = pnand %p205, %p206
    %p208 = pneg %p207
    // Predicated region
    $region37: #{tpu_custom_call.1} parent=5 // pred_check
      _
    $region38: #{tpu_custom_call.1} parent=5 // pred_check_branch
      %210 = sbr.rel (%p207) target = $region40
    $region39: #{tpu_custom_call.1} parent=5 // pred_region
      %s211 = ssub.s32 %s13, 1
      %p212 = scmp.lt.s32.totalorder %s22, 1
      %s213 = scalar_select %p212, %s22, 1
      %p214 = scmp.lt.s32.totalorder %s23, 1
      %s215 = scalar_select %p214, %s23, 1
      %s216 = smul.addr %s213, 2
      %s217 = sadd.s32 %s215, %s216
      %s218 = smul.addr %s217, 4
      %s219 = scalar_lea.vmem %s0, %s218
      %p220 = pneg %p53
      %p221 = pneg %p50
      %p222 = pneg %p74
      %p223 = pneg %p71
      %p224 = pneg %p95
      %p225 = pneg %p92
      %p226 = pneg %p116
      %p227 = pneg %p113
      %p228 = pneg %p137
      %p229 = pneg %p134
      %p230 = pneg %p163
      %p231 = pneg %p160
      %p232 = scmp.lt.s32.totalorder %s22, 1
      %s233 = scalar_select %p232, %s22, 1
      %s234 = scalar_lea.vmem %s5, %s233
      %p235 = scmp.lt.s32.totalorder %s22, 1
      %s236 = scalar_select %p235, %s22, 1
      %p237 = scmp.lt.s32.totalorder %s23, 1
      %s238 = scalar_select %p237, %s23, 1
      %s239 = smul.addr %s236, 2
      %s240 = sadd.s32 %s238, %s239
      %s241 = smul.addr %s240, 4
      %s242 = scalar_lea.vmem %s0, %s241
      %p243 = scmp.lt.s32.totalorder %s22, 1
      %s244 = scalar_select %p243, %s22, 1
      %s245 = scalar_lea.vmem %s5, %s244
      %v246 = vld [vmem:[%s242] sm:$0x7]
      %v247 = vld [vmem:[%s1] sm:$0xff]
      %v248 = vld [vmem:[%s1 + $0x8] sm:$0xff]
      %v249 = vld [vmem:[%s1 + $0x10] sm:$0xff]
      %v250 = vld [vmem:[%s1 + $0x18] sm:$0xff]
      %v251 = vld [vmem:[%s1 + $0x20] sm:$0xff]
      %v252 = vld [vmem:[%s1 + $0x28] sm:$0xff]
      %v253 = vld [vmem:[%s1 + $0x30] sm:$0xff]
      %v254 = vld [vmem:[%s1 + $0x38] sm:$0xff]
      %v255 = vld [vmem:[%s1 + $0x40] sm:$0xff]
      %v256 = vld [vmem:[%s1 + $0x48] sm:$0xff]
      %v257 = vld [vmem:[%s1 + $0x50] sm:$0xff]
      %v258 = vld [vmem:[%s1 + $0x58] sm:$0xff]
      %v259 = vld [vmem:[%s1 + $0x60] sm:$0xff]
      %v260 = vld [vmem:[%s1 + $0x68] sm:$0xff]
      %v261 = vld [vmem:[%s1 + $0x70] sm:$0xff]
      %v262 = vld [vmem:[%s1 + $0x78] sm:$0xff]
      %v263 = vld [vmem:[%s2] sm:$0xff]
      %v264 = vld [vmem:[%s2 + $0x8] sm:$0xff]
      %v265 = vld [vmem:[%s2 + $0x10] sm:$0xff]
      %v266 = vld [vmem:[%s2 + $0x18] sm:$0xff]
      %v267 = vld [vmem:[%s2 + $0x20] sm:$0xff]
      %v268 = vld [vmem:[%s2 + $0x28] sm:$0xff]
      %v269 = vld [vmem:[%s2 + $0x30] sm:$0xff]
      %v270 = vld [vmem:[%s2 + $0x38] sm:$0xff]
      %v271 = vld [vmem:[%s2 + $0x40] sm:$0xff]
      %v272 = vld [vmem:[%s2 + $0x48] sm:$0xff]
      %v273 = vld [vmem:[%s2 + $0x50] sm:$0xff]
      %v274 = vld [vmem:[%s2 + $0x58] sm:$0xff]
      %v275 = vld [vmem:[%s2 + $0x60] sm:$0xff]
      %v276 = vld [vmem:[%s2 + $0x68] sm:$0xff]
      %v277 = vld [vmem:[%s2 + $0x70] sm:$0xff]
      %v278 = vld [vmem:[%s2 + $0x78] sm:$0xff]
      %280 = vset.pattern.permute.xlu0 0
      %281 = vperm.xlu0 %280, %v263
      %v282 = vpop.permute.xlu0 %281
      %285 = vset.pattern.permute.xlu0 0
      %286 = vperm.xlu0 %285, %v264
      %v287 = vpop.permute.xlu0 %286
      %290 = vset.pattern.permute.xlu0 0
      %291 = vperm.xlu0 %290, %v265
      %v292 = vpop.permute.xlu0 %291
      %295 = vset.pattern.permute.xlu0 0
      %296 = vperm.xlu0 %295, %v266
      %v297 = vpop.permute.xlu0 %296
      %300 = vset.pattern.permute.xlu0 0
      %301 = vperm.xlu0 %300, %v267
      %v302 = vpop.permute.xlu0 %301
      %305 = vset.pattern.permute.xlu0 0
      %306 = vperm.xlu0 %305, %v268
      %v307 = vpop.permute.xlu0 %306
      %310 = vset.pattern.permute.xlu0 0
      %311 = vperm.xlu0 %310, %v269
      %v312 = vpop.permute.xlu0 %311
      %315 = vset.pattern.permute.xlu0 0
      %316 = vperm.xlu0 %315, %v270
      %v317 = vpop.permute.xlu0 %316
      %320 = vset.pattern.permute.xlu0 0
      %321 = vperm.xlu0 %320, %v271
      %v322 = vpop.permute.xlu0 %321
      %325 = vset.pattern.permute.xlu0 0
      %326 = vperm.xlu0 %325, %v272
      %v327 = vpop.permute.xlu0 %326
      %330 = vset.pattern.permute.xlu0 0
      %331 = vperm.xlu0 %330, %v273
      %v332 = vpop.permute.xlu0 %331
      %335 = vset.pattern.permute.xlu0 0
      %336 = vperm.xlu0 %335, %v274
      %v337 = vpop.permute.xlu0 %336
      %340 = vset.pattern.permute.xlu0 0
      %341 = vperm.xlu0 %340, %v275
      %v342 = vpop.permute.xlu0 %341
      %345 = vset.pattern.permute.xlu0 0
      %346 = vperm.xlu0 %345, %v276
      %v347 = vpop.permute.xlu0 %346
      %350 = vset.pattern.permute.xlu0 0
      %351 = vperm.xlu0 %350, %v277
      %v352 = vpop.permute.xlu0 %351
      %355 = vset.pattern.permute.xlu0 0
      %356 = vperm.xlu0 %355, %v278
      %v357 = vpop.permute.xlu0 %356
      %vm359 = vcmask 23552
      %v361 = vsel %vm359, %v247, 0
      %v364 = vsel %vm359, %v248, 0
      %v367 = vsel %vm359, %v249, 0
      %v370 = vsel %vm359, %v250, 0
      %v373 = vsel %vm359, %v251, 0
      %v376 = vsel %vm359, %v252, 0
      %v379 = vsel %vm359, %v253, 0
      %v382 = vsel %vm359, %v254, 0
      %v385 = vsel %vm359, %v255, 0
      %v388 = vsel %vm359, %v256, 0
      %v391 = vsel %vm359, %v257, 0
      %v394 = vsel %vm359, %v258, 0
      %v397 = vsel %vm359, %v259, 0
      %v400 = vsel %vm359, %v260, 0
      %v403 = vsel %vm359, %v261, 0
      %v406 = vsel %vm359, %v262, 0
      %vm408 = vcmask 1042432
      %v410 = vsel %vm408, %v246, 0
      %412 = vmatprep.subr.mxu0 0.0
      %413 = vmatpush1.msra.mxu0 0.0
      %414 = vmatprep.subr.mxu0 0.0
      %415 = vmatpush1.msra.mxu0 0.0
      %416 = vmatprep.subr.mxu0 0.0
      %417 = vmatpush1.msra.mxu0 0.0
      %418 = vmatprep.subr.mxu0 0.0
      %419 = vmatpush1.msra.mxu0 0.0
      %420 = vmatprep.subr.mxu0 0.0
      %421 = vmatpush1.msra.mxu0 0.0
      %422 = vmatprep.subr.mxu0 0.0
      %423 = vmatpush1.msra.mxu0 0.0
      %424 = vmatprep.subr.mxu0 0.0
      %425 = vmatpush1.msra.mxu0 0.0
      %426 = vmatprep.subr.mxu0 0.0
      %427 = vmatpush1.msra.mxu0 0.0
      %428 = vmatprep.subr.mxu0 0.0
      %429 = vmatpush1.msra.mxu0 0.0
      %430 = vmatprep.subr.mxu0 0.0
      %431 = vmatpush1.msra.mxu0 0.0
      %432 = vmatprep.subr.mxu0 0.0
      %433 = vmatpush1.msra.mxu0 0.0
      %434 = vmatprep.subr.mxu0 0.0
      %435 = vmatpush1.msra.mxu0 0.0
      %436 = vmatprep.subr.mxu0 0.0
      %437 = vmatpush1.msra.mxu0 0.0
      %438 = vmatprep.subr.mxu0 0.0
      %439 = vmatpush1.msra.mxu0 0.0
      %440 = vmatprep.subr.mxu0 0.0
      %441 = vmatpush1.msra.mxu0 0.0
      %442 = vmatprep.subr.mxu0 0.0
      %443 = vmatpush1.msra.mxu0 %v410
      %444 = vmatprep.subr.mxu0 0.0
      %445 = vmatpush2.msra.mxu0 0.0
      %446 = vmatprep.subr.mxu0 0.0
      %447 = vmatpush2.msra.mxu0 0.0
      %448 = vmatprep.subr.mxu0 0.0
      %449 = vmatpush2.msra.mxu0 0.0
      %450 = vmatprep.subr.mxu0 0.0
      %451 = vmatpush2.msra.mxu0 0.0
      %452 = vmatprep.subr.mxu0 0.0
      %453 = vmatpush2.msra.mxu0 0.0
      %454 = vmatprep.subr.mxu0 0.0
      %455 = vmatpush2.msra.mxu0 0.0
      %456 = vmatprep.subr.mxu0 0.0
      %457 = vmatpush2.msra.mxu0 0.0
      %458 = vmatprep.subr.mxu0 0.0
      %459 = vmatpush2.msra.mxu0 0.0
      %460 = vmatprep.subr.mxu0 0.0
      %461 = vmatpush2.msra.mxu0 0.0
      %462 = vmatprep.subr.mxu0 0.0
      %463 = vmatpush2.msra.mxu0 0.0
      %464 = vmatprep.subr.mxu0 0.0
      %465 = vmatpush2.msra.mxu0 0.0
      %466 = vmatprep.subr.mxu0 0.0
      %467 = vmatpush2.msra.mxu0 0.0
      %468 = vmatprep.subr.mxu0 0.0
      %469 = vmatpush2.msra.mxu0 0.0
      %470 = vmatprep.subr.mxu0 0.0
      %471 = vmatpush2.msra.mxu0 0.0
      %472 = vmatprep.subr.mxu0 0.0
      %473 = vmatpush2.msra.mxu0 0.0
      %474 = vmatprep.subr.mxu0 0.0
      %475 = vmatpush2.msra.mxu0 0.0
      %476 = vmatprep.mubr.f32.mxu0 0.0
      %477 = vmatmul.mubr.f32.gmra.mxu0 %v361
      %v478 = vpop.f32.mrf.mxu0
      %v479 = vadd.f32 %v282, %v478
      %v480 = vpop.f32.mrf.mxu0
      %481 = vmatprep.mubr.f32.mxu0 0.0
      %482 = vmatmul.mubr.f32.gmra.mxu0 %v364
      %v483 = vpop.f32.mrf.mxu0
      %v484 = vadd.f32 %v287, %v483
      %v485 = vpop.f32.mrf.mxu0
      %486 = vmatprep.mubr.f32.mxu0 0.0
      %487 = vmatmul.mubr.f32.gmra.mxu0 %v367
      %v488 = vpop.f32.mrf.mxu0
      %v489 = vadd.f32 %v292, %v488
      %v490 = vpop.f32.mrf.mxu0
      %491 = vmatprep.mubr.f32.mxu0 0.0
      %492 = vmatmul.mubr.f32.gmra.mxu0 %v370
      %v493 = vpop.f32.mrf.mxu0
      %v494 = vadd.f32 %v297, %v493
      %v495 = vpop.f32.mrf.mxu0
      %496 = vmatprep.mubr.f32.mxu0 0.0
      %497 = vmatmul.mubr.f32.gmra.mxu0 %v373
      %v498 = vpop.f32.mrf.mxu0
      %v499 = vadd.f32 %v302, %v498
      %v500 = vpop.f32.mrf.mxu0
      %501 = vmatprep.mubr.f32.mxu0 0.0
      %502 = vmatmul.mubr.f32.gmra.mxu0 %v376
      %v503 = vpop.f32.mrf.mxu0
      %v504 = vadd.f32 %v307, %v503
      %v505 = vpop.f32.mrf.mxu0
      %506 = vmatprep.mubr.f32.mxu0 0.0
      %507 = vmatmul.mubr.f32.gmra.mxu0 %v379
      %v508 = vpop.f32.mrf.mxu0
      %v509 = vadd.f32 %v312, %v508
      %v510 = vpop.f32.mrf.mxu0
      %511 = vmatprep.mubr.f32.mxu0 0.0
      %512 = vmatmul.mubr.f32.gmra.mxu0 %v382
      %v513 = vpop.f32.mrf.mxu0
      %v514 = vadd.f32 %v317, %v513
      %v515 = vpop.f32.mrf.mxu0
      %516 = vmatprep.mubr.f32.mxu0 0.0
      %517 = vmatmul.mubr.f32.gmra.mxu0 %v385
      %v518 = vpop.f32.mrf.mxu0
      %v519 = vadd.f32 %v322, %v518
      %v520 = vpop.f32.mrf.mxu0
      %521 = vmatprep.mubr.f32.mxu0 0.0
      %522 = vmatmul.mubr.f32.gmra.mxu0 %v388
      %v523 = vpop.f32.mrf.mxu0
      %v524 = vadd.f32 %v327, %v523
      %v525 = vpop.f32.mrf.mxu0
      %526 = vmatprep.mubr.f32.mxu0 0.0
      %527 = vmatmul.mubr.f32.gmra.mxu0 %v391
      %v528 = vpop.f32.mrf.mxu0
      %v529 = vadd.f32 %v332, %v528
      %v530 = vpop.f32.mrf.mxu0
      %531 = vmatprep.mubr.f32.mxu0 0.0
      %532 = vmatmul.mubr.f32.gmra.mxu0 %v394
      %v533 = vpop.f32.mrf.mxu0
      %v534 = vadd.f32 %v337, %v533
      %v535 = vpop.f32.mrf.mxu0
      %536 = vmatprep.mubr.f32.mxu0 0.0
      %537 = vmatmul.mubr.f32.gmra.mxu0 %v397
      %v538 = vpop.f32.mrf.mxu0
      %v539 = vadd.f32 %v342, %v538
      %v540 = vpop.f32.mrf.mxu0
      %541 = vmatprep.mubr.f32.mxu0 0.0
      %542 = vmatmul.mubr.f32.gmra.mxu0 %v400
      %v543 = vpop.f32.mrf.mxu0
      %v544 = vadd.f32 %v347, %v543
      %v545 = vpop.f32.mrf.mxu0
      %546 = vmatprep.mubr.f32.mxu0 0.0
      %547 = vmatmul.mubr.f32.gmra.mxu0 %v403
      %v548 = vpop.f32.mrf.mxu0
      %v549 = vadd.f32 %v352, %v548
      %v550 = vpop.f32.mrf.mxu0
      %551 = vmatprep.mubr.f32.mxu0 0.0
      %552 = vmatmul.mubr.f32.gmra.mxu0 %v406
      %v553 = vpop.f32.mrf.mxu0
      %v554 = vadd.f32 %v357, %v553
      %v555 = vpop.f32.mrf.mxu0
      %556 = vdwg.mxu0
      %v557 = vmax.f32 %v479, 0.0
      %v558 = vmax.f32 %v484, 0.0
      %v559 = vmax.f32 %v489, 0.0
      %v560 = vmax.f32 %v494, 0.0
      %v561 = vmax.f32 %v499, 0.0
      %v562 = vmax.f32 %v504, 0.0
      %v563 = vmax.f32 %v509, 0.0
      %v564 = vmax.f32 %v514, 0.0
      %v565 = vmax.f32 %v519, 0.0
      %v566 = vmax.f32 %v524, 0.0
      %v567 = vmax.f32 %v529, 0.0
      %v568 = vmax.f32 %v534, 0.0
      %v569 = vmax.f32 %v539, 0.0
      %v570 = vmax.f32 %v544, 0.0
      %v571 = vmax.f32 %v549, 0.0
      %v572 = vmax.f32 %v554, 0.0
      %v573 = vld [vmem:[%s3] sm:$0x1]
      %v574 = vld [vmem:[#allocation3] sm:$0x1]
      %576 = vset.pattern.permute.xlu0 0
      %577 = vperm.xlu0 %576, %v574
      %v578 = vpop.permute.xlu0 %577
      %v580 = vlaneseq
      %v581 = vshrl.u32 %v580, 7
      %v582 = vsub.s32 0, %v581
      %v583 = vrot.slane %v578, %v582
      %584 = vmatprep.subr.mxu0 0.0
      %585 = vmatpush1.msra.mxu0 %v572
      %586 = vmatprep.subr.mxu0 0.0
      %587 = vmatpush1.msra.mxu0 %v571
      %588 = vmatprep.subr.mxu0 0.0
      %589 = vmatpush1.msra.mxu0 %v570
      %590 = vmatprep.subr.mxu0 0.0
      %591 = vmatpush1.msra.mxu0 %v569
      %592 = vmatprep.subr.mxu0 0.0
      %593 = vmatpush1.msra.mxu0 %v568
      %594 = vmatprep.subr.mxu0 0.0
      %595 = vmatpush1.msra.mxu0 %v567
      %596 = vmatprep.subr.mxu0 0.0
      %597 = vmatpush1.msra.mxu0 %v566
      %598 = vmatprep.subr.mxu0 0.0
      %599 = vmatpush1.msra.mxu0 %v565
      %600 = vmatprep.subr.mxu0 0.0
      %601 = vmatpush1.msra.mxu0 %v564
      %602 = vmatprep.subr.mxu0 0.0
      %603 = vmatpush1.msra.mxu0 %v563
      %604 = vmatprep.subr.mxu0 0.0
      %605 = vmatpush1.msra.mxu0 %v562
      %606 = vmatprep.subr.mxu0 0.0
      %607 = vmatpush1.msra.mxu0 %v561
      %608 = vmatprep.subr.mxu0 0.0
      %609 = vmatpush1.msra.mxu0 %v560
      %610 = vmatprep.subr.mxu0 0.0
      %611 = vmatpush1.msra.mxu0 %v559
      %612 = vmatprep.subr.mxu0 0.0
      %613 = vmatpush1.msra.mxu0 %v558
      %614 = vmatprep.subr.mxu0 0.0
      %615 = vmatpush1.msra.mxu0 %v557
      %616 = vmatprep.subr.mxu0 0.0
      %617 = vmatpush2.msra.mxu0 0.0
      %618 = vmatprep.subr.mxu0 0.0
      %619 = vmatpush2.msra.mxu0 0.0
      %620 = vmatprep.subr.mxu0 0.0
      %621 = vmatpush2.msra.mxu0 0.0
      %622 = vmatprep.subr.mxu0 0.0
      %623 = vmatpush2.msra.mxu0 0.0
      %624 = vmatprep.subr.mxu0 0.0
      %625 = vmatpush2.msra.mxu0 0.0
      %626 = vmatprep.subr.mxu0 0.0
      %627 = vmatpush2.msra.mxu0 0.0
      %628 = vmatprep.subr.mxu0 0.0
      %629 = vmatpush2.msra.mxu0 0.0
      %630 = vmatprep.subr.mxu0 0.0
      %631 = vmatpush2.msra.mxu0 0.0
      %632 = vmatprep.subr.mxu0 0.0
      %633 = vmatpush2.msra.mxu0 0.0
      %634 = vmatprep.subr.mxu0 0.0
      %635 = vmatpush2.msra.mxu0 0.0
      %636 = vmatprep.subr.mxu0 0.0
      %637 = vmatpush2.msra.mxu0 0.0
      %638 = vmatprep.subr.mxu0 0.0
      %639 = vmatpush2.msra.mxu0 0.0
      %640 = vmatprep.subr.mxu0 0.0
      %641 = vmatpush2.msra.mxu0 0.0
      %642 = vmatprep.subr.mxu0 0.0
      %643 = vmatpush2.msra.mxu0 0.0
      %644 = vmatprep.subr.mxu0 0.0
      %645 = vmatpush2.msra.mxu0 0.0
      %646 = vmatprep.subr.mxu0 0.0
      %647 = vmatpush2.msra.mxu0 0.0
      %648 = vmatprep.mubr.f32.mxu0 0.0
      %649 = vmatmul.mubr.f32.gmra.mxu0 %v573
      %v650 = vpop.f32.mrf.mxu0
      %v651 = vadd.f32 %v583, %v650
      %v652 = vpop.f32.mrf.mxu0
      %653 = vdwg.mxu0
      %s654 = smul.u32 %s23, 128
      %s655 = sshra.s32 %s654, 7
      %s656 = sand.u32 %s654, 127
      %s657 = scalar_lea.vmem [#allocation2], %s655
      %v658 = vlaneseq
      %vm659 = vcmp.ge.s32.totalorder %v658, 0
      %vm660 = vcmp.lt.s32.totalorder %v658, 128
      %vm661 = vmand %vm659, %vm660
      %662 = vst.msk [vmem:[%s657] sm:$0x1] %vm661, %v651
      %p663 = scmp.eq.s32.totalorder %s23, 1
      // Predicated region
      $region41: #{tpu_custom_call.1} parent=39 // pred_check
        %p664 = pneg %p663
      $region42: #{tpu_custom_call.1} parent=39 // pred_check_branch
        %666 = sbr.rel (%p664) target = $region44
      $region43: #{tpu_custom_call.1} parent=39 // pred_region
        %v667 = vld [vmem:[#allocation2] sm:$0x3]
        %v668 = vand.u32 2147483647, %v667
        %v670 = vlaneseq
        %v671 = vshrl.u32 %v670, 7
        %v672 = vsub.s32 0, %v671
        %v673 = vrot.slane %v668, %v672
        %v674 = vlaneseq
        %v675 = vshrl.u32 %v674, 7
        %v676 = vsub.s32 1, %v675
        %v677 = vrot.slane %v668, %v676
        %vm680 = vcmask 1040384
        %v681 = vsel %vm680, %v673, -inf
        %v682 = vsel %vm680, %v677, -inf
        %v683 = vmax.f32 %v681, %v682
        %684 = vmax.xlane.f32.xlu0 %v683
        %v685 = vpop.xlane.xlu0 %684
        %v686 = vadd.f32 %v685, 0.0
        %v687 = vmul.f32 %v686, 0.5
        %v689 = vlaneseq
        %v690 = vshrl.u32 %v689, 7
        %v691 = vsub.s32 0, %v690
        %v692 = vrot.slane %v687, %v691
        %vm694 = vcmp.gt.f32.partialorder %v668, %v692
        %v695 = vsel %vm694, 1, 0
        %v696 = vcvt.s32.f32 %v695
        %v698 = vlaneseq
        %v699 = vshrl.u32 %v698, 7
        %v700 = vsub.s32 0, %v699
        %v701 = vrot.slane %v696, %v700
        %v702 = vlaneseq
        %v703 = vshrl.u32 %v702, 7
        %v704 = vsub.s32 1, %v703
        %v705 = vrot.slane %v696, %v704
        %v708 = vsel %vm680, %v701, 0.0
        %v709 = vsel %vm680, %v705, 0.0
        %v710 = vadd.f32 %v708, %v709
        %711 = vadd.xlane.f32.xlu0 %v710
        %v712 = vpop.xlane.xlu0 %711
        %vm713 = vcmp.ge.f32.partialorder %v712, 25.0
        %v714 = vsel %vm713, %v687, 0.0
        %v715 = vsel %vm713, %v685, %v687
        %v716 = vadd.f32 %v714, %v715
        %v717 = vmul.f32 %v716, 0.5
        %v719 = vlaneseq
        %v720 = vshrl.u32 %v719, 7
        %v721 = vsub.s32 0, %v720
        %v722 = vrot.slane %v717, %v721
        %vm724 = vcmp.gt.f32.partialorder %v668, %v722
        %v725 = vsel %vm724, 1, 0
        %v726 = vcvt.s32.f32 %v725
        %v728 = vlaneseq
        %v729 = vshrl.u32 %v728, 7
        %v730 = vsub.s32 0, %v729
        %v731 = vrot.slane %v726, %v730
        %v732 = vlaneseq
        %v733 = vshrl.u32 %v732, 7
        %v734 = vsub.s32 1, %v733
        %v735 = vrot.slane %v726, %v734
        %v738 = vsel %vm680, %v731, 0.0
        %v739 = vsel %vm680, %v735, 0.0
        %v740 = vadd.f32 %v738, %v739
        %741 = vadd.xlane.f32.xlu0 %v740
        %v742 = vpop.xlane.xlu0 %741
        %vm743 = vcmp.ge.f32.partialorder %v742, 25.0
        %v744 = vsel %vm743, %v717, %v714
        %v745 = vsel %vm743, %v715, %v717
        %v746 = vadd.f32 %v744, %v745
        %v747 = vmul.f32 %v746, 0.5
        %v749 = vlaneseq
        %v750 = vshrl.u32 %v749, 7
        %v751 = vsub.s32 0, %v750
        %v752 = vrot.slane %v747, %v751
        %vm754 = vcmp.gt.f32.partialorder %v668, %v752
        %v755 = vsel %vm754, 1, 0
        %v756 = vcvt.s32.f32 %v755
        %v758 = vlaneseq
        %v759 = vshrl.u32 %v758, 7
        %v760 = vsub.s32 0, %v759
        %v761 = vrot.slane %v756, %v760
        %v762 = vlaneseq
        %v763 = vshrl.u32 %v762, 7
        %v764 = vsub.s32 1, %v763
        %v765 = vrot.slane %v756, %v764
        %v768 = vsel %vm680, %v761, 0.0
        %v769 = vsel %vm680, %v765, 0.0
        %v770 = vadd.f32 %v768, %v769
        %771 = vadd.xlane.f32.xlu0 %v770
        %v772 = vpop.xlane.xlu0 %771
        %vm773 = vcmp.ge.f32.partialorder %v772, 25.0
        %v774 = vsel %vm773, %v747, %v744
        %v775 = vsel %vm773, %v745, %v747
        %v776 = vadd.f32 %v774, %v775
        %v777 = vmul.f32 %v776, 0.5
        %v779 = vlaneseq
        %v780 = vshrl.u32 %v779, 7
        %v781 = vsub.s32 0, %v780
        %v782 = vrot.slane %v777, %v781
        %vm784 = vcmp.gt.f32.partialorder %v668, %v782
        %v785 = vsel %vm784, 1, 0
        %v786 = vcvt.s32.f32 %v785
        %v788 = vlaneseq
        %v789 = vshrl.u32 %v788, 7
        %v790 = vsub.s32 0, %v789
        %v791 = vrot.slane %v786, %v790
        %v792 = vlaneseq
        %v793 = vshrl.u32 %v792, 7
        %v794 = vsub.s32 1, %v793
        %v795 = vrot.slane %v786, %v794
        %v798 = vsel %vm680, %v791, 0.0
        %v799 = vsel %vm680, %v795, 0.0
        %v800 = vadd.f32 %v798, %v799
        %801 = vadd.xlane.f32.xlu0 %v800
        %v802 = vpop.xlane.xlu0 %801
        %vm803 = vcmp.ge.f32.partialorder %v802, 25.0
        %v804 = vsel %vm803, %v777, %v774
        %v805 = vsel %vm803, %v775, %v777
        %v806 = vadd.f32 %v804, %v805
        %v807 = vmul.f32 %v806, 0.5
        %v809 = vlaneseq
        %v810 = vshrl.u32 %v809, 7
        %v811 = vsub.s32 0, %v810
        %v812 = vrot.slane %v807, %v811
        %vm814 = vcmp.gt.f32.partialorder %v668, %v812
        %v815 = vsel %vm814, 1, 0
        %v816 = vcvt.s32.f32 %v815
        %v818 = vlaneseq
        %v819 = vshrl.u32 %v818, 7
        %v820 = vsub.s32 0, %v819
        %v821 = vrot.slane %v816, %v820
        %v822 = vlaneseq
        %v823 = vshrl.u32 %v822, 7
        %v824 = vsub.s32 1, %v823
        %v825 = vrot.slane %v816, %v824
        %v828 = vsel %vm680, %v821, 0.0
        %v829 = vsel %vm680, %v825, 0.0
        %v830 = vadd.f32 %v828, %v829
        %831 = vadd.xlane.f32.xlu0 %v830
        %v832 = vpop.xlane.xlu0 %831
        %vm833 = vcmp.ge.f32.partialorder %v832, 25.0
        %v834 = vsel %vm833, %v807, %v804
        %v835 = vsel %vm833, %v805, %v807
        %v836 = vadd.f32 %v834, %v835
        %v837 = vmul.f32 %v836, 0.5
        %v839 = vlaneseq
        %v840 = vshrl.u32 %v839, 7
        %v841 = vsub.s32 0, %v840
        %v842 = vrot.slane %v837, %v841
        %vm844 = vcmp.gt.f32.partialorder %v668, %v842
        %v845 = vsel %vm844, 1, 0
        %v846 = vcvt.s32.f32 %v845
        %v848 = vlaneseq
        %v849 = vshrl.u32 %v848, 7
        %v850 = vsub.s32 0, %v849
        %v851 = vrot.slane %v846, %v850
        %v852 = vlaneseq
        %v853 = vshrl.u32 %v852, 7
        %v854 = vsub.s32 1, %v853
        %v855 = vrot.slane %v846, %v854
        %v858 = vsel %vm680, %v851, 0.0
        %v859 = vsel %vm680, %v855, 0.0
        %v860 = vadd.f32 %v858, %v859
        %861 = vadd.xlane.f32.xlu0 %v860
        %v862 = vpop.xlane.xlu0 %861
        %vm863 = vcmp.ge.f32.partialorder %v862, 25.0
        %v864 = vsel %vm863, %v837, %v834
        %v865 = vsel %vm863, %v835, %v837
        %v866 = vadd.f32 %v864, %v865
        %v867 = vmul.f32 %v866, 0.5
        %v869 = vlaneseq
        %v870 = vshrl.u32 %v869, 7
        %v871 = vsub.s32 0, %v870
        %v872 = vrot.slane %v867, %v871
        %vm874 = vcmp.gt.f32.partialorder %v668, %v872
        %v875 = vsel %vm874, 1, 0
        %v876 = vcvt.s32.f32 %v875
        %v878 = vlaneseq
        %v879 = vshrl.u32 %v878, 7
        %v880 = vsub.s32 0, %v879
        %v881 = vrot.slane %v876, %v880
        %v882 = vlaneseq
        %v883 = vshrl.u32 %v882, 7
        %v884 = vsub.s32 1, %v883
        %v885 = vrot.slane %v876, %v884
        %v888 = vsel %vm680, %v881, 0.0
        %v889 = vsel %vm680, %v885, 0.0
        %v890 = vadd.f32 %v888, %v889
        %891 = vadd.xlane.f32.xlu0 %v890
        %v892 = vpop.xlane.xlu0 %891
        %vm893 = vcmp.ge.f32.partialorder %v892, 25.0
        %v894 = vsel %vm893, %v867, %v864
        %v895 = vsel %vm893, %v865, %v867
        %v896 = vadd.f32 %v894, %v895
        %v897 = vmul.f32 %v896, 0.5
        %v899 = vlaneseq
        %v900 = vshrl.u32 %v899, 7
        %v901 = vsub.s32 0, %v900
        %v902 = vrot.slane %v897, %v901
        %vm904 = vcmp.gt.f32.partialorder %v668, %v902
        %v905 = vsel %vm904, 1, 0
        %v906 = vcvt.s32.f32 %v905
        %v908 = vlaneseq
        %v909 = vshrl.u32 %v908, 7
        %v910 = vsub.s32 0, %v909
        %v911 = vrot.slane %v906, %v910
        %v912 = vlaneseq
        %v913 = vshrl.u32 %v912, 7
        %v914 = vsub.s32 1, %v913
        %v915 = vrot.slane %v906, %v914
        %v918 = vsel %vm680, %v911, 0.0
        %v919 = vsel %vm680, %v915, 0.0
        %v920 = vadd.f32 %v918, %v919
        %921 = vadd.xlane.f32.xlu0 %v920
        %v922 = vpop.xlane.xlu0 %921
        %vm923 = vcmp.ge.f32.partialorder %v922, 25.0
        %v924 = vsel %vm923, %v897, %v894
        %v925 = vsel %vm923, %v895, %v897
        %v926 = vadd.f32 %v924, %v925
        %v927 = vmul.f32 %v926, 0.5
        %v929 = vlaneseq
        %v930 = vshrl.u32 %v929, 7
        %v931 = vsub.s32 0, %v930
        %v932 = vrot.slane %v927, %v931
        %vm934 = vcmp.gt.f32.partialorder %v668, %v932
        %v935 = vsel %vm934, 1, 0
        %v936 = vcvt.s32.f32 %v935
        %v938 = vlaneseq
        %v939 = vshrl.u32 %v938, 7
        %v940 = vsub.s32 0, %v939
        %v941 = vrot.slane %v936, %v940
        %v942 = vlaneseq
        %v943 = vshrl.u32 %v942, 7
        %v944 = vsub.s32 1, %v943
        %v945 = vrot.slane %v936, %v944
        %v948 = vsel %vm680, %v941, 0.0
        %v949 = vsel %vm680, %v945, 0.0
        %v950 = vadd.f32 %v948, %v949
        %951 = vadd.xlane.f32.xlu0 %v950
        %v952 = vpop.xlane.xlu0 %951
        %vm953 = vcmp.ge.f32.partialorder %v952, 25.0
        %v954 = vsel %vm953, %v927, %v924
        %v955 = vsel %vm953, %v925, %v927
        %v956 = vadd.f32 %v954, %v955
        %v957 = vmul.f32 %v956, 0.5
        %v959 = vlaneseq
        %v960 = vshrl.u32 %v959, 7
        %v961 = vsub.s32 0, %v960
        %v962 = vrot.slane %v957, %v961
        %vm964 = vcmp.gt.f32.partialorder %v668, %v962
        %v965 = vsel %vm964, 1, 0
        %v966 = vcvt.s32.f32 %v965
        %v968 = vlaneseq
        %v969 = vshrl.u32 %v968, 7
        %v970 = vsub.s32 0, %v969
        %v971 = vrot.slane %v966, %v970
        %v972 = vlaneseq
        %v973 = vshrl.u32 %v972, 7
        %v974 = vsub.s32 1, %v973
        %v975 = vrot.slane %v966, %v974
        %v978 = vsel %vm680, %v971, 0.0
        %v979 = vsel %vm680, %v975, 0.0
        %v980 = vadd.f32 %v978, %v979
        %981 = vadd.xlane.f32.xlu0 %v980
        %v982 = vpop.xlane.xlu0 %981
        %vm983 = vcmp.ge.f32.partialorder %v982, 25.0
        %v984 = vsel %vm983, %v957, %v954
        %v985 = vsel %vm983, %v955, %v957
        %v986 = vadd.f32 %v984, %v985
        %v987 = vmul.f32 %v986, 0.5
        %v989 = vlaneseq
        %v990 = vshrl.u32 %v989, 7
        %v991 = vsub.s32 0, %v990
        %v992 = vrot.slane %v987, %v991
        %vm994 = vcmp.gt.f32.partialorder %v668, %v992
        %v995 = vsel %vm994, 1, 0
        %v996 = vcvt.s32.f32 %v995
        %v998 = vlaneseq
        %v999 = vshrl.u32 %v998, 7
        %v1000 = vsub.s32 0, %v999
        %v1001 = vrot.slane %v996, %v1000
        %v1002 = vlaneseq
        %v1003 = vshrl.u32 %v1002, 7
        %v1004 = vsub.s32 1, %v1003
        %v1005 = vrot.slane %v996, %v1004
        %v1008 = vsel %vm680, %v1001, 0.0
        %v1009 = vsel %vm680, %v1005, 0.0
        %v1010 = vadd.f32 %v1008, %v1009
        %1011 = vadd.xlane.f32.xlu0 %v1010
        %v1012 = vpop.xlane.xlu0 %1011
        %vm1013 = vcmp.ge.f32.partialorder %v1012, 25.0
        %v1014 = vsel %vm1013, %v987, %v984
        %v1015 = vsel %vm1013, %v985, %v987
        %v1016 = vadd.f32 %v1014, %v1015
        %v1017 = vmul.f32 %v1016, 0.5
        %v1019 = vlaneseq
        %v1020 = vshrl.u32 %v1019, 7
        %v1021 = vsub.s32 0, %v1020
        %v1022 = vrot.slane %v1017, %v1021
        %vm1024 = vcmp.gt.f32.partialorder %v668, %v1022
        %v1025 = vsel %vm1024, 1, 0
        %v1026 = vcvt.s32.f32 %v1025
        %v1028 = vlaneseq
        %v1029 = vshrl.u32 %v1028, 7
        %v1030 = vsub.s32 0, %v1029
        %v1031 = vrot.slane %v1026, %v1030
        %v1032 = vlaneseq
        %v1033 = vshrl.u32 %v1032, 7
        %v1034 = vsub.s32 1, %v1033
        %v1035 = vrot.slane %v1026, %v1034
        %v1038 = vsel %vm680, %v1031, 0.0
        %v1039 = vsel %vm680, %v1035, 0.0
        %v1040 = vadd.f32 %v1038, %v1039
        %1041 = vadd.xlane.f32.xlu0 %v1040
        %v1042 = vpop.xlane.xlu0 %1041
        %vm1043 = vcmp.ge.f32.partialorder %v1042, 25.0
        %v1044 = vsel %vm1043, %v1017, %v1014
        %v1045 = vsel %vm1043, %v1015, %v1017
        %v1046 = vadd.f32 %v1044, %v1045
        %v1047 = vmul.f32 %v1046, 0.5
        %v1049 = vlaneseq
        %v1050 = vshrl.u32 %v1049, 7
        %v1051 = vsub.s32 0, %v1050
        %v1052 = vrot.slane %v1047, %v1051
        %vm1054 = vcmp.gt.f32.partialorder %v668, %v1052
        %v1055 = vsel %vm1054, 1, 0
        %v1056 = vcvt.s32.f32 %v1055
        %v1058 = vlaneseq
        %v1059 = vshrl.u32 %v1058, 7
        %v1060 = vsub.s32 0, %v1059
        %v1061 = vrot.slane %v1056, %v1060
        %v1062 = vlaneseq
        %v1063 = vshrl.u32 %v1062, 7
        %v1064 = vsub.s32 1, %v1063
        %v1065 = vrot.slane %v1056, %v1064
        %v1068 = vsel %vm680, %v1061, 0.0
        %v1069 = vsel %vm680, %v1065, 0.0
        %v1070 = vadd.f32 %v1068, %v1069
        %1071 = vadd.xlane.f32.xlu0 %v1070
        %v1072 = vpop.xlane.xlu0 %1071
        %vm1073 = vcmp.ge.f32.partialorder %v1072, 25.0
        %v1074 = vsel %vm1073, %v1047, %v1044
        %v1075 = vsel %vm1073, %v1045, %v1047
        %v1076 = vadd.f32 %v1074, %v1075
        %v1077 = vmul.f32 %v1076, 0.5
        %v1079 = vlaneseq
        %v1080 = vshrl.u32 %v1079, 7
        %v1081 = vsub.s32 0, %v1080
        %v1082 = vrot.slane %v1077, %v1081
        %vm1084 = vcmp.gt.f32.partialorder %v668, %v1082
        %v1085 = vsel %vm1084, 1, 0
        %v1086 = vcvt.s32.f32 %v1085
        %v1088 = vlaneseq
        %v1089 = vshrl.u32 %v1088, 7
        %v1090 = vsub.s32 0, %v1089
        %v1091 = vrot.slane %v1086, %v1090
        %v1092 = vlaneseq
        %v1093 = vshrl.u32 %v1092, 7
        %v1094 = vsub.s32 1, %v1093
        %v1095 = vrot.slane %v1086, %v1094
        %v1098 = vsel %vm680, %v1091, 0.0
        %v1099 = vsel %vm680, %v1095, 0.0
        %v1100 = vadd.f32 %v1098, %v1099
        %1101 = vadd.xlane.f32.xlu0 %v1100
        %v1102 = vpop.xlane.xlu0 %1101
        %vm1103 = vcmp.ge.f32.partialorder %v1102, 25.0
        %v1104 = vsel %vm1103, %v1077, %v1074
        %v1105 = vsel %vm1103, %v1075, %v1077
        %v1106 = vadd.f32 %v1104, %v1105
        %v1107 = vmul.f32 %v1106, 0.5
        %v1109 = vlaneseq
        %v1110 = vshrl.u32 %v1109, 7
        %v1111 = vsub.s32 0, %v1110
        %v1112 = vrot.slane %v1107, %v1111
        %vm1114 = vcmp.gt.f32.partialorder %v668, %v1112
        %v1115 = vsel %vm1114, 1, 0
        %v1116 = vcvt.s32.f32 %v1115
        %v1118 = vlaneseq
        %v1119 = vshrl.u32 %v1118, 7
        %v1120 = vsub.s32 0, %v1119
        %v1121 = vrot.slane %v1116, %v1120
        %v1122 = vlaneseq
        %v1123 = vshrl.u32 %v1122, 7
        %v1124 = vsub.s32 1, %v1123
        %v1125 = vrot.slane %v1116, %v1124
        %v1128 = vsel %vm680, %v1121, 0.0
        %v1129 = vsel %vm680, %v1125, 0.0
        %v1130 = vadd.f32 %v1128, %v1129
        %1131 = vadd.xlane.f32.xlu0 %v1130
        %v1132 = vpop.xlane.xlu0 %1131
        %vm1133 = vcmp.ge.f32.partialorder %v1132, 25.0
        %v1134 = vsel %vm1133, %v1107, %v1104
        %v1135 = vsel %vm1133, %v1105, %v1107
        %v1136 = vadd.f32 %v1134, %v1135
        %v1137 = vmul.f32 %v1136, 0.5
        %v1139 = vlaneseq
        %v1140 = vshrl.u32 %v1139, 7
        %v1141 = vsub.s32 0, %v1140
        %v1142 = vrot.slane %v1137, %v1141
        %vm1144 = vcmp.gt.f32.partialorder %v668, %v1142
        %v1145 = vsel %vm1144, 1, 0
        %v1146 = vcvt.s32.f32 %v1145
        %v1148 = vlaneseq
        %v1149 = vshrl.u32 %v1148, 7
        %v1150 = vsub.s32 0, %v1149
        %v1151 = vrot.slane %v1146, %v1150
        %v1152 = vlaneseq
        %v1153 = vshrl.u32 %v1152, 7
        %v1154 = vsub.s32 1, %v1153
        %v1155 = vrot.slane %v1146, %v1154
        %v1158 = vsel %vm680, %v1151, 0.0
        %v1159 = vsel %vm680, %v1155, 0.0
        %v1160 = vadd.f32 %v1158, %v1159
        %1161 = vadd.xlane.f32.xlu0 %v1160
        %v1162 = vpop.xlane.xlu0 %1161
        %vm1163 = vcmp.ge.f32.partialorder %v1162, 25.0
        %v1164 = vsel %vm1163, %v1137, %v1134
        %v1165 = vsel %vm1163, %v1135, %v1137
        %v1166 = vadd.f32 %v1164, %v1165
        %v1167 = vmul.f32 %v1166, 0.5
        %v1169 = vlaneseq
        %v1170 = vshrl.u32 %v1169, 7
        %v1171 = vsub.s32 0, %v1170
        %v1172 = vrot.slane %v1167, %v1171
        %vm1174 = vcmp.gt.f32.partialorder %v668, %v1172
        %v1175 = vsel %vm1174, 1, 0
        %v1176 = vcvt.s32.f32 %v1175
        %v1178 = vlaneseq
        %v1179 = vshrl.u32 %v1178, 7
        %v1180 = vsub.s32 0, %v1179
        %v1181 = vrot.slane %v1176, %v1180
        %v1182 = vlaneseq
        %v1183 = vshrl.u32 %v1182, 7
        %v1184 = vsub.s32 1, %v1183
        %v1185 = vrot.slane %v1176, %v1184
        %v1188 = vsel %vm680, %v1181, 0.0
        %v1189 = vsel %vm680, %v1185, 0.0
        %v1190 = vadd.f32 %v1188, %v1189
        %1191 = vadd.xlane.f32.xlu0 %v1190
        %v1192 = vpop.xlane.xlu0 %1191
        %vm1193 = vcmp.ge.f32.partialorder %v1192, 25.0
        %v1194 = vsel %vm1193, %v1167, %v1164
        %v1195 = vsel %vm1193, %v1165, %v1167
        %v1196 = vadd.f32 %v1194, %v1195
        %v1197 = vmul.f32 %v1196, 0.5
        %v1199 = vlaneseq
        %v1200 = vshrl.u32 %v1199, 7
        %v1201 = vsub.s32 0, %v1200
        %v1202 = vrot.slane %v1197, %v1201
        %vm1204 = vcmp.gt.f32.partialorder %v668, %v1202
        %v1205 = vsel %vm1204, 1, 0
        %v1206 = vcvt.s32.f32 %v1205
        %v1208 = vlaneseq
        %v1209 = vshrl.u32 %v1208, 7
        %v1210 = vsub.s32 0, %v1209
        %v1211 = vrot.slane %v1206, %v1210
        %v1212 = vlaneseq
        %v1213 = vshrl.u32 %v1212, 7
        %v1214 = vsub.s32 1, %v1213
        %v1215 = vrot.slane %v1206, %v1214
        %v1218 = vsel %vm680, %v1211, 0.0
        %v1219 = vsel %vm680, %v1215, 0.0
        %v1220 = vadd.f32 %v1218, %v1219
        %1221 = vadd.xlane.f32.xlu0 %v1220
        %v1222 = vpop.xlane.xlu0 %1221
        %vm1223 = vcmp.ge.f32.partialorder %v1222, 25.0
        %v1224 = vsel %vm1223, %v1195, %v1197
        %v1226 = vlaneseq
        %v1227 = vshrl.u32 %v1226, 7
        %v1228 = vsub.s32 0, %v1227
        %v1229 = vrot.slane %v1224, %v1228
        %vm1231 = vcmp.gt.f32.partialorder %v668, %v1229
        %v1232 = vsel %vm1231, 1, 0
        %v1233 = vcvt.s32.f32 %v1232
        %v1234 = vmul.f32 %v668, %v1233
        %v1236 = vlaneseq
        %v1237 = vshrl.u32 %v1236, 7
        %v1238 = vsub.s32 0, %v1237
        %v1239 = vrot.slane %v1234, %v1238
        %v1240 = vlaneseq
        %v1241 = vshrl.u32 %v1240, 7
        %v1242 = vsub.s32 1, %v1241
        %v1243 = vrot.slane %v1234, %v1242
        %v1246 = vsel %vm680, %v1239, 0.0
        %v1247 = vsel %vm680, %v1243, 0.0
        %v1248 = vadd.f32 %v1246, %v1247
        %1249 = vadd.xlane.f32.xlu0 %v1248
        %v1250 = vpop.xlane.xlu0 %1249
        %v1252 = vlaneseq
        %v1253 = vshrl.u32 %v1252, 7
        %v1254 = vsub.s32 0, %v1253
        %v1255 = vrot.slane %v1233, %v1254
        %v1256 = vlaneseq
        %v1257 = vshrl.u32 %v1256, 7
        %v1258 = vsub.s32 1, %v1257
        %v1259 = vrot.slane %v1233, %v1258
        %v1262 = vsel %vm680, %v1255, 0.0
        %v1263 = vsel %vm680, %v1259, 0.0
        %v1264 = vadd.f32 %v1262, %v1263
        %1265 = vadd.xlane.f32.xlu0 %v1264
        %v1266 = vpop.xlane.xlu0 %1265
        %v1267 = vsub.f32 25.0, %v1266
        %v1268 = vmul.f32 %v1267, %v1224
        %v1269 = vadd.f32 %v1250, %v1268
        %v1270 = vmul.f32 %v1269, 0.04
        %vm1271 = vcmask 0
        %1272 = vst.msk [vmem:[%s245] sm:$0x1] %vm1271, %v1270
      $region44: #{tpu_custom_call.1} parent=39 // pred_fallthru
        _
      %p1273 = scmp.lt.s32.totalorder %s22, 1
      %s1274 = scalar_select %p1273, %s22, 1
      %s1275 = scalar_lea.vmem %s5, %s1274
      // Predicated region
      $region45: #{tpu_custom_call.1} parent=39 // pred_check
        %p1276 = pneg %p160
      $region46: #{tpu_custom_call.1} parent=39 // pred_check_branch
        %1278 = sbr.rel (%p1276) target = $region48
      $region47: #{tpu_custom_call.1} parent=39 // pred_region
        _
      $region48: #{tpu_custom_call.1} parent=39 // pred_fallthru
        _
    $region40: #{tpu_custom_call.1} parent=5 // pred_fallthru
      _
    %p1279 = scmp.le.s32.totalorder 2, %s13
    // Predicated region
    $region49: #{tpu_custom_call.1} parent=5 // pred_check
      %p1280 = pneg %p1279
    $region50: #{tpu_custom_call.1} parent=5 // pred_check_branch
      %1282 = sbr.rel (%p1280) target = $region52
    $region51: #{tpu_custom_call.1} parent=5 // pred_region
      %s1283 = ssub.s32 %s13, 2
      // Predicated region
      $region53: #{tpu_custom_call.1} parent=51 // pred_check
        %p1284 = pneg %p166
      $region54: #{tpu_custom_call.1} parent=51 // pred_check_branch
        %1286 = sbr.rel (%p1284) target = $region56
      $region55: #{tpu_custom_call.1} parent=51 // pred_region
        %p1287 = scmp.lt.s32.totalorder %s24, 1
        %s1288 = scalar_select %p1287, %s24, 1
        %s1289 = scalar_lea.vmem %s5, %s1288
      $region56: #{tpu_custom_call.1} parent=51 // pred_fallthru
        _
    $region52: #{tpu_custom_call.1} parent=5 // pred_fallthru
      _
  $region6: #{tpu_custom_call.1} parent=0 // loop_footer
    %s17 = sadd.s32 1, %s13
  $region7: #{tpu_custom_call.1} parent=0 // loop_footer_branch
    %12 = sbr.rel target = $region3
  $region8: #{tpu_custom_call.1} parent=0 // loop_exit
    _

</llo_original>
